<compile_context>
chip_gen: v5e
topology: v5e:2x2
jax: 0.10.0
libtpu: 0.0.40
codegen_flags: <defaults>
</compile_context>

<pallas_src>
import functools

import jax
import jax.numpy as jnp
from jax.experimental import pallas as pl
from jax.experimental.pallas import tpu as pltpu


# --------------------------------------------------------------------------
# helpers
# --------------------------------------------------------------------------
def _round_up(x, m):
    return ((x + m - 1) // m) * m


def _pick_tile_m(nm_pad):
    """Largest lane tile in {512,256,128} dividing the (128-padded) lane extent."""
    for t in (512, 256, 128):
        if nm_pad % t == 0:
            return t
    return nm_pad  # unreachable: nm_pad is always a multiple of 128


def _im2col_cnhw(x, KH, KW, padding):
    """x: (Cin, N, H, W) bf16  ->  patches (K, NM_pad) bf16 with K-order
    (cin, kh, kw) and column order (n, h, w); padded columns are exact zeros."""
    Cin, N, H, W = x.shape
    Hout = H + 2 * padding - KH + 1
    Wout = W + 2 * padding - KW + 1
    if padding > 0:
        xp = jnp.pad(x, ((0, 0), (0, 0), (padding, padding), (padding, padding)))
    else:
        xp = x
    taps = [xp[:, :, kh:kh + Hout, kw:kw + Wout]
            for kh in range(KH) for kw in range(KW)]
    patches = jnp.stack(taps, axis=1)                 # (Cin, KH*KW, N, Hout, Wout)
    K = Cin * KH * KW
    NM = N * Hout * Wout
    patches = patches.reshape(K, NM)
    NM_pad = _round_up(NM, 128)
    if NM_pad > NM:
        patches = jnp.pad(patches, ((0, 0), (0, NM_pad - NM)))
    return patches, Hout, Wout, NM


# --------------------------------------------------------------------------
# Pallas kernels
# --------------------------------------------------------------------------
def _conv_kernel(x_ref, w_ref, b_ref, o_ref, *, relu):
    # x_ref: (K, TM) bf16   w_ref: (Cout, K) bf16   b_ref: (Cout, 1) f32
    acc = jnp.dot(w_ref[...], x_ref[...], preferred_element_type=jnp.float32)
    acc = acc + b_ref[...]
    if relu:
        acc = jnp.maximum(acc, 0.0)
    o_ref[...] = acc.astype(o_ref.dtype)


def _conv_stats_kernel(x_ref, w_ref, o_ref, psum_ref, psq_ref):
    # Bias-free conv + per-grid-step partial (sum, sumsq) over the lane axis.
    # Padded columns are all-zero patches with no bias, so they contribute 0.
    acc = jnp.dot(w_ref[...], x_ref[...], preferred_element_type=jnp.float32)
    o_ref[...] = acc.astype(o_ref.dtype)
    s = jnp.sum(acc, axis=1, keepdims=True)           # (Cout, 1)
    q = jnp.sum(acc * acc, axis=1, keepdims=True)
    psum_ref[...] = jnp.broadcast_to(s, psum_ref.shape)
    psq_ref[...] = jnp.broadcast_to(q, psq_ref.shape)


def _maxpool_kernel(x_ref, o_ref, *, ntaps):
    # x_ref: (ntaps, C, TM); pure VPU max over the leading tap axis.
    m = x_ref[0]
    for i in range(1, ntaps):
        m = jnp.maximum(m, x_ref[i])
    o_ref[...] = m.astype(o_ref.dtype)


def _bn_relu_maxpool_kernel(x_ref, scale_ref, shift_ref, o_ref, *, ntaps):
    # Folded BatchNorm (per-channel scale/shift) + ReLU on every tap, then max
    # (same op order as BN -> ReLU -> MaxPool in the reference module).
    scale = scale_ref[...]                             # (C, 1) f32
    shift = shift_ref[...]

    def tap(i):
        return jnp.maximum(x_ref[i].astype(jnp.float32) * scale + shift, 0.0)

    m = tap(0)
    for i in range(1, ntaps):
        m = jnp.maximum(m, tap(i))
    o_ref[...] = m.astype(o_ref.dtype)


# --------------------------------------------------------------------------
# Layer wrappers (internal activation layout: channel-major (C, N, H, W), bf16)
# --------------------------------------------------------------------------
def conv2d(x, w, b, *, padding, relu=True):
    """x: (Cin,N,H,W) bf16   w: (Cout,Cin,KH,KW)   b: (Cout,)   stride 1."""
    Cin, N, H, W = x.shape
    Cout, _, KH, KW = w.shape
    patches, Hout, Wout, NM = _im2col_cnhw(x, KH, KW, padding)
    K, NM_pad = patches.shape
    TM = _pick_tile_m(NM_pad)

    w2 = w.reshape(Cout, K).astype(jnp.bfloat16)
    b2 = b.reshape(Cout, 1).astype(jnp.float32)

    out = pl.pallas_call(
        functools.partial(_conv_kernel, relu=relu),
        out_shape=jax.ShapeDtypeStruct((Cout, NM_pad), jnp.bfloat16),
        grid=(NM_pad // TM,),
        in_specs=[
            pl.BlockSpec((K, TM), lambda m: (0, m)),
            pl.BlockSpec((Cout, K), lambda m: (0, 0)),
            pl.BlockSpec((Cout, 1), lambda m: (0, 0)),
        ],
        out_specs=pl.BlockSpec((Cout, TM), lambda m: (0, m)),
        compiler_params=pltpu.CompilerParams(dimension_semantics=("parallel",)),
    )(patches, w2, b2)
    return out[:, :NM].reshape(Cout, N, Hout, Wout)


def conv2d_bn_stats(x, w, *, padding):
    """Bias-free conv; also returns per-channel sum / sumsq (from f32 acc) and
    the element count for the following training-mode BatchNorm."""
    Cin, N, H, W = x.shape
    Cout, _, KH, KW = w.shape
    patches, Hout, Wout, NM = _im2col_cnhw(x, KH, KW, padding)
    K, NM_pad = patches.shape
    TM = _pick_tile_m(NM_pad)
    nt = NM_pad // TM

    w2 = w.reshape(Cout, K).astype(jnp.bfloat16)

    out, psum, psq = pl.pallas_call(
        _conv_stats_kernel,
        out_shape=(jax.ShapeDtypeStruct((Cout, NM_pad), jnp.bfloat16),
                   jax.ShapeDtypeStruct((Cout, nt * 128), jnp.float32),
                   jax.ShapeDtypeStruct((Cout, nt * 128), jnp.float32)),
        grid=(nt,),
        in_specs=[
            pl.BlockSpec((K, TM), lambda m: (0, m)),
            pl.BlockSpec((Cout, K), lambda m: (0, 0)),
        ],
        out_specs=(pl.BlockSpec((Cout, TM), lambda m: (0, m)),
                   pl.BlockSpec((Cout, 128), lambda m: (0, m)),
                   pl.BlockSpec((Cout, 128), lambda m: (0, m))),
        compiler_params=pltpu.CompilerParams(dimension_semantics=("parallel",)),
    )(patches, w2)

    ssum = psum.reshape(Cout, nt, 128)[:, :, 0].sum(axis=1)
    ssq = psq.reshape(Cout, nt, 128)[:, :, 0].sum(axis=1)
    act = out[:, :NM].reshape(Cout, N, Hout, Wout)
    return act, ssum, ssq, float(NM)


def maxpool(x, ksize, *, scale=None, shift=None):
    """kernel == stride max pooling on (C,N,H,W) bf16; optional per-channel
    scale/shift + ReLU (folded BatchNorm) applied per tap inside the kernel."""
    C, N, H, W = x.shape
    kh, kw = ksize
    Hout, Wout = H // kh, W // kw
    NMo = N * Hout * Wout

    # Tap stack built by XLA: (kh*kw, C, N*Hout*Wout), lane-dense columns.
    taps = jnp.stack(
        [x[:, :, i:kh * Hout:kh, j:kw * Wout:kw].reshape(C, NMo)
         for i in range(kh) for j in range(kw)], axis=0)
    NMp = _round_up(NMo, 128)
    if NMp > NMo:
        taps = jnp.pad(taps, ((0, 0), (0, 0), (0, NMp - NMo)))
    TM = _pick_tile_m(NMp)
    ntaps = kh * kw
    grid = (NMp // TM,)
    cp = pltpu.CompilerParams(dimension_semantics=("parallel",))

    if scale is None:
        out = pl.pallas_call(
            functools.partial(_maxpool_kernel, ntaps=ntaps),
            out_shape=jax.ShapeDtypeStruct((C, NMp), jnp.bfloat16),
            grid=grid,
            in_specs=[pl.BlockSpec((ntaps, C, TM), lambda m: (0, 0, m))],
            out_specs=pl.BlockSpec((C, TM), lambda m: (0, m)),
            compiler_params=cp,
        )(taps)
    else:
        sc = scale.reshape(C, 1).astype(jnp.float32)
        sh = shift.reshape(C, 1).astype(jnp.float32)
        out = pl.pallas_call(
            functools.partial(_bn_relu_maxpool_kernel, ntaps=ntaps),
            out_shape=jax.ShapeDtypeStruct((C, NMp), jnp.bfloat16),
            grid=grid,
            in_specs=[
                pl.BlockSpec((ntaps, C, TM), lambda m: (0, 0, m)),
                pl.BlockSpec((C, 1), lambda m: (0, 0)),
                pl.BlockSpec((C, 1), lambda m: (0, 0)),
            ],
            out_specs=pl.BlockSpec((C, TM), lambda m: (0, m)),
            compiler_params=cp,
        )(taps, sc, sh)
    return out[:, :NMo].reshape(C, N, Hout, Wout)


def _bn_scale_shift(ssum, ssq, count, gamma, beta, eps=1e-5):
    """Training-mode BatchNorm2d (biased batch variance) folded to scale/shift."""
    mean = ssum / count
    var = jnp.maximum(ssq / count - mean * mean, 0.0)   # guard against cancellation
    scale = gamma / jnp.sqrt(var + eps)
    shift = beta - mean * scale
    return scale, shift


# --------------------------------------------------------------------------
# Parameter init (deterministic, mirrors the module's __init__ shapes)
# --------------------------------------------------------------------------
def init_vgg_params(key, input_channel=1, output_channel=32):
    oc = [output_channel // 8, output_channel // 4,
          output_channel // 2, output_channel]
    # (cin, cout, kernel, has_bias)
    conv_defs = [
        (input_channel, oc[0], 3, True),
        (oc[0], oc[1], 3, True),
        (oc[1], oc[2], 3, True),
        (oc[2], oc[2], 3, True),
        (oc[2], oc[3], 3, False),
        (oc[3], oc[3], 3, False),
        (oc[3], oc[3], 2, True),
    ]
    params = {"convs": [], "bn": []}
    for (cin, cout, k, has_bias) in conv_defs:
        key, wk, bk = jax.random.split(key, 3)
        fan_in = cin * k * k
        w = jax.random.normal(wk, (cout, cin, k, k), jnp.float32) / float(fan_in) ** 0.5
        if has_bias:
            bound = 1.0 / float(fan_in) ** 0.5
            b = jax.random.uniform(bk, (cout,), jnp.float32, -bound, bound)
        else:
            b = jnp.zeros((cout,), jnp.float32)
        params["convs"].append({"w": w, "b": b})
    for _ in range(2):  # two BatchNorm2d layers on oc[3]; default gamma=1, beta=0
        params["bn"].append({"gamma": jnp.ones((oc[3],), jnp.float32),
                             "beta": jnp.zeros((oc[3],), jnp.float32)})
    return params


# --------------------------------------------------------------------------
# Full forward pass (mirrors nn.Sequential in the PyTorch module)
# --------------------------------------------------------------------------
def vgg_forward(params, x_nchw):
    cv = params["convs"]
    bn = params["bn"]
    # channel-major internal layout, bf16 activations
    x = jnp.transpose(x_nchw, (1, 0, 2, 3)).astype(jnp.bfloat16)

    x = conv2d(x, cv[0]["w"], cv[0]["b"], padding=1, relu=True)
    x = maxpool(x, (2, 2))
    x = conv2d(x, cv[1]["w"], cv[1]["b"], padding=1, relu=True)
    x = maxpool(x, (2, 2))
    x = conv2d(x, cv[2]["w"], cv[2]["b"], padding=1, relu=True)
    x = conv2d(x, cv[3]["w"], cv[3]["b"], padding=1, relu=True)
    x = maxpool(x, (2, 1))

    # conv4 (bias-free) + fused per-grid-step batch statistics
    a4, s4, q4, n4 = conv2d_bn_stats(x, cv[4]["w"], padding=1)
    scale4, shift4 = _bn_scale_shift(s4, q4, n4, bn[0]["gamma"], bn[0]["beta"])

    # BN(conv4) + ReLU applied in XLA (fuses with conv5's im2col; zero padding
    # of conv5 stays exact).  No pad-value tricks.
    a4 = jnp.maximum(
        a4.astype(jnp.float32) * scale4[:, None, None, None]
        + shift4[:, None, None, None], 0.0).astype(jnp.bfloat16)

    # conv5 (bias-free) + fused batch statistics
    a5, s5, q5, n5 = conv2d_bn_stats(a4, cv[5]["w"], padding=1)
    scale5, shift5 = _bn_scale_shift(s5, q5, n5, bn[1]["gamma"], bn[1]["beta"])

    # BN(conv5) + ReLU folded into the (2,1) max-pool kernel
    x = maxpool(a5, (2, 1), scale=scale5, shift=shift5)

    x = conv2d(x, cv[6]["w"], cv[6]["b"], padding=0, relu=True)
    # back to NCHW, f32, like the PyTorch module output
    return jnp.transpose(x, (1, 0, 2, 3)).astype(jnp.float32)


# --------------------------------------------------------------------------
if __name__ == "__main__":
    key = jax.random.PRNGKey(0)
    pkey, xkey = jax.random.split(key)

    # Small, consistent shapes: batch=2, input_channel=1, 32x32 image,
    # output_channel=32  ->  channel progression [4, 8, 16, 32].
    params = init_vgg_params(pkey, input_channel=1, output_channel=32)
    x = jax.random.normal(xkey, (2, 1, 32, 32), jnp.float32)

    fwd = jax.jit(vgg_forward)
    out = jax.block_until_ready(fwd(params, x))

    # Expected NCHW output: (2, 32, 1, 7)  (H: 32->16->8->4->2->1, W: 32->16->8->8->7)
    assert out.shape == (2, 32, 1, 7), out.shape
    assert bool(jnp.all(jnp.isfinite(out)))
    print("KERNEL_OK")
</pallas_src>

<mosaic_0001>
module attributes {stable_mosaic.version = 11 : i64} {
  func.func @_conv_kernel(%arg0: i32, %arg1: memref<9x512xbf16, #tpu.memory_space<vmem>>, %arg2: memref<4x9xbf16, #tpu.memory_space<vmem>>, %arg3: memref<4x1xf32, #tpu.memory_space<vmem>>, %arg4: memref<4x512xbf16, #tpu.memory_space<vmem>>) attributes {dimension_semantics = [#tpu.dimension_semantics<parallel>], iteration_bounds = array<i64: 4>, scalar_prefetch = 0 : i64, scratch_operands = 0 : i64, tpu.core_type = #tpu.core_type<tc>, window_params = [{transform_indices = @transform_0, window_bounds = array<i64: 9, 512>}, {pipeline_mode = #tpu.pipeline_mode<synchronous>, transform_indices = @transform_1, window_bounds = array<i64: 4, 9>}, {pipeline_mode = #tpu.pipeline_mode<synchronous>, transform_indices = @transform_2, window_bounds = array<i64: 4, 1>}, {transform_indices = @transform_3, window_bounds = array<i64: 4, 512>}]} {
    %c0 = arith.constant 0 : index
    %c0_0 = arith.constant 0 : index
    %0 = vector.load %arg2[%c0, %c0_0] : memref<4x9xbf16, #tpu.memory_space<vmem>>, vector<4x9xbf16>
    %c0_1 = arith.constant 0 : index
    %c0_2 = arith.constant 0 : index
    %1 = vector.load %arg1[%c0_1, %c0_2] : memref<9x512xbf16, #tpu.memory_space<vmem>>, vector<9x512xbf16>
    %cst = arith.constant dense<0.000000e+00> : vector<4x512xf32>
    %2 = tpu.matmul %0, %1, %cst {dimension_numbers = #tpu.dot_dimension_numbers<[1], [0], [0], [1], [0, 0, 1, 1], [], []>} : vector<4x9xbf16>, vector<9x512xbf16>, vector<4x512xf32> -> vector<4x512xf32>
    %c0_3 = arith.constant 0 : index
    %c0_4 = arith.constant 0 : index
    %3 = vector.load %arg3[%c0_3, %c0_4] : memref<4x1xf32, #tpu.memory_space<vmem>>, vector<4x1xf32>
    %4 = vector.broadcast %3 : vector<4x1xf32> to vector<4x512xf32>
    %5 = arith.addf %2, %4 : vector<4x512xf32>
    %cst_5 = arith.constant 0.000000e+00 : f32
    %6 = vector.broadcast %cst_5 : f32 to vector<4x512xf32>
    %7 = arith.maximumf %5, %6 : vector<4x512xf32>
    %8 = arith.truncf %7 : vector<4x512xf32> to vector<4x512xbf16>
    %c0_6 = arith.constant 0 : index
    %c0_7 = arith.constant 0 : index
    %9 = vector.load %arg4[%c0_6, %c0_7] : memref<4x512xbf16, #tpu.memory_space<vmem>>, vector<4x512xbf16>
    tpu.vector_store %arg4[%c0_6, %c0_7], %8 {strides = array<i32>} : memref<4x512xbf16, #tpu.memory_space<vmem>>, vector<4x512xbf16>,
    return
  }
  func.func @transform_0(%arg0: i32) -> (i32, i32) {
    %c0_i32 = arith.constant 0 : i32
    %c0_i32_0 = arith.constant 0 : i32
    return %c0_i32, %arg0 : i32, i32
  }
  func.func @transform_1(%arg0: i32) -> (i32, i32) {
    %c0_i32 = arith.constant 0 : i32
    %c0_i32_0 = arith.constant 0 : i32
    %c0_i32_1 = arith.constant 0 : i32
    return %c0_i32, %c0_i32_0 : i32, i32
  }
  func.func @transform_2(%arg0: i32) -> (i32, i32) {
    %c0_i32 = arith.constant 0 : i32
    %c0_i32_0 = arith.constant 0 : i32
    %c0_i32_1 = arith.constant 0 : i32
    return %c0_i32, %c0_i32_0 : i32, i32
  }
  func.func @transform_3(%arg0: i32) -> (i32, i32) {
    %c0_i32 = arith.constant 0 : i32
    %c0_i32_0 = arith.constant 0 : i32
    return %c0_i32, %arg0 : i32, i32
  }
}

module attributes {stable_mosaic.version = 11 : i64} {
  func.func @_maxpool_kernel(%arg0: i32, %arg1: memref<4x4x512xbf16, #tpu.memory_space<vmem>>, %arg2: memref<4x512xbf16, #tpu.memory_space<vmem>>) attributes {dimension_semantics = [#tpu.dimension_semantics<parallel>], iteration_bounds = array<i64: 1>, scalar_prefetch = 0 : i64, scratch_operands = 0 : i64, tpu.core_type = #tpu.core_type<tc>, window_params = [{transform_indices = @transform_0, window_bounds = array<i64: 4, 4, 512>}, {transform_indices = @transform_1, window_bounds = array<i64: 4, 512>}]} {
    %c0 = arith.constant 0 : index
    %c0_0 = arith.constant 0 : index
    %c0_1 = arith.constant 0 : index
    %0 = vector.load %arg1[%c0, %c0_0, %c0_1] : memref<4x4x512xbf16, #tpu.memory_space<vmem>>, vector<1x4x512xbf16>
    %1 = vector.shape_cast %0 : vector<1x4x512xbf16> to vector<4x512xbf16>
    %c1 = arith.constant 1 : index
    %c0_2 = arith.constant 0 : index
    %c0_3 = arith.constant 0 : index
    %2 = vector.load %arg1[%c1, %c0_2, %c0_3] : memref<4x4x512xbf16, #tpu.memory_space<vmem>>, vector<1x4x512xbf16>
    %3 = vector.shape_cast %2 : vector<1x4x512xbf16> to vector<4x512xbf16>
    %4 = arith.maximumf %1, %3 : vector<4x512xbf16>
    %c2 = arith.constant 2 : index
    %c0_4 = arith.constant 0 : index
    %c0_5 = arith.constant 0 : index
    %5 = vector.load %arg1[%c2, %c0_4, %c0_5] : memref<4x4x512xbf16, #tpu.memory_space<vmem>>, vector<1x4x512xbf16>
    %6 = vector.shape_cast %5 : vector<1x4x512xbf16> to vector<4x512xbf16>
    %7 = arith.maximumf %4, %6 : vector<4x512xbf16>
    %c3 = arith.constant 3 : index
    %c0_6 = arith.constant 0 : index
    %c0_7 = arith.constant 0 : index
    %8 = vector.load %arg1[%c3, %c0_6, %c0_7] : memref<4x4x512xbf16, #tpu.memory_space<vmem>>, vector<1x4x512xbf16>
    %9 = vector.shape_cast %8 : vector<1x4x512xbf16> to vector<4x512xbf16>
    %10 = arith.maximumf %7, %9 : vector<4x512xbf16>
    %c0_8 = arith.constant 0 : index
    %c0_9 = arith.constant 0 : index
    %11 = vector.load %arg2[%c0_8, %c0_9] : memref<4x512xbf16, #tpu.memory_space<vmem>>, vector<4x512xbf16>
    tpu.vector_store %arg2[%c0_8, %c0_9], %10 {strides = array<i32>} : memref<4x512xbf16, #tpu.memory_space<vmem>>, vector<4x512xbf16>,
    return
  }
  func.func @transform_0(%arg0: i32) -> (i32, i32, i32) {
    %c0_i32 = arith.constant 0 : i32
    %c0_i32_0 = arith.constant 0 : i32
    %c0_i32_1 = arith.constant 0 : i32
    return %c0_i32, %c0_i32_0, %arg0 : i32, i32, i32
  }
  func.func @transform_1(%arg0: i32) -> (i32, i32) {
    %c0_i32 = arith.constant 0 : i32
    %c0_i32_0 = arith.constant 0 : i32
    return %c0_i32, %arg0 : i32, i32
  }
}

module attributes {stable_mosaic.version = 11 : i64} {
  func.func @_conv_kernel(%arg0: i32, %arg1: memref<36x512xbf16, #tpu.memory_space<vmem>>, %arg2: memref<8x36xbf16, #tpu.memory_space<vmem>>, %arg3: memref<8x1xf32, #tpu.memory_space<vmem>>, %arg4: memref<8x512xbf16, #tpu.memory_space<vmem>>) attributes {dimension_semantics = [#tpu.dimension_semantics<parallel>], iteration_bounds = array<i64: 1>, scalar_prefetch = 0 : i64, scratch_operands = 0 : i64, tpu.core_type = #tpu.core_type<tc>, window_params = [{transform_indices = @transform_0, window_bounds = array<i64: 36, 512>}, {pipeline_mode = #tpu.pipeline_mode<synchronous>, transform_indices = @transform_1, window_bounds = array<i64: 8, 36>}, {pipeline_mode = #tpu.pipeline_mode<synchronous>, transform_indices = @transform_2, window_bounds = array<i64: 8, 1>}, {transform_indices = @transform_3, window_bounds = array<i64: 8, 512>}]} {
    %c0 = arith.constant 0 : index
    %c0_0 = arith.constant 0 : index
    %0 = vector.load %arg2[%c0, %c0_0] : memref<8x36xbf16, #tpu.memory_space<vmem>>, vector<8x36xbf16>
    %c0_1 = arith.constant 0 : index
    %c0_2 = arith.constant 0 : index
    %1 = vector.load %arg1[%c0_1, %c0_2] : memref<36x512xbf16, #tpu.memory_space<vmem>>, vector<36x512xbf16>
    %cst = arith.constant dense<0.000000e+00> : vector<8x512xf32>
    %2 = tpu.matmul %0, %1, %cst {dimension_numbers = #tpu.dot_dimension_numbers<[1], [0], [0], [1], [0, 0, 1, 1], [], []>} : vector<8x36xbf16>, vector<36x512xbf16>, vector<8x512xf32> -> vector<8x512xf32>
    %c0_3 = arith.constant 0 : index
    %c0_4 = arith.constant 0 : index
    %3 = vector.load %arg3[%c0_3, %c0_4] : memref<8x1xf32, #tpu.memory_space<vmem>>, vector<8x1xf32>
    %4 = vector.broadcast %3 : vector<8x1xf32> to vector<8x512xf32>
    %5 = arith.addf %2, %4 : vector<8x512xf32>
    %cst_5 = arith.constant 0.000000e+00 : f32
    %6 = vector.broadcast %cst_5 : f32 to vector<8x512xf32>
    %7 = arith.maximumf %5, %6 : vector<8x512xf32>
    %8 = arith.truncf %7 : vector<8x512xf32> to vector<8x512xbf16>
    %c0_6 = arith.constant 0 : index
    %c0_7 = arith.constant 0 : index
    %9 = vector.load %arg4[%c0_6, %c0_7] : memref<8x512xbf16, #tpu.memory_space<vmem>>, vector<8x512xbf16>
    tpu.vector_store %arg4[%c0_6, %c0_7], %8 {strides = array<i32>} : memref<8x512xbf16, #tpu.memory_space<vmem>>, vector<8x512xbf16>,
    return
  }
  func.func @transform_0(%arg0: i32) -> (i32, i32) {
    %c0_i32 = arith.constant 0 : i32
    %c0_i32_0 = arith.constant 0 : i32
    return %c0_i32, %arg0 : i32, i32
  }
  func.func @transform_1(%arg0: i32) -> (i32, i32) {
    %c0_i32 = arith.constant 0 : i32
    %c0_i32_0 = arith.constant 0 : i32
    %c0_i32_1 = arith.constant 0 : i32
    return %c0_i32, %c0_i32_0 : i32, i32
  }
  func.func @transform_2(%arg0: i32) -> (i32, i32) {
    %c0_i32 = arith.constant 0 : i32
    %c0_i32_0 = arith.constant 0 : i32
    %c0_i32_1 = arith.constant 0 : i32
    return %c0_i32, %c0_i32_0 : i32, i32
  }
  func.func @transform_3(%arg0: i32) -> (i32, i32) {
    %c0_i32 = arith.constant 0 : i32
    %c0_i32_0 = arith.constant 0 : i32
    return %c0_i32, %arg0 : i32, i32
  }
}

module attributes {stable_mosaic.version = 11 : i64} {
  func.func @_maxpool_kernel(%arg0: i32, %arg1: memref<4x8x128xbf16, #tpu.memory_space<vmem>>, %arg2: memref<8x128xbf16, #tpu.memory_space<vmem>>) attributes {dimension_semantics = [#tpu.dimension_semantics<parallel>], iteration_bounds = array<i64: 1>, scalar_prefetch = 0 : i64, scratch_operands = 0 : i64, tpu.core_type = #tpu.core_type<tc>, window_params = [{transform_indices = @transform_0, window_bounds = array<i64: 4, 8, 128>}, {transform_indices = @transform_1, window_bounds = array<i64: 8, 128>}]} {
    %c0 = arith.constant 0 : index
    %c0_0 = arith.constant 0 : index
    %c0_1 = arith.constant 0 : index
    %0 = vector.load %arg1[%c0, %c0_0, %c0_1] : memref<4x8x128xbf16, #tpu.memory_space<vmem>>, vector<1x8x128xbf16>
    %1 = vector.shape_cast %0 : vector<1x8x128xbf16> to vector<8x128xbf16>
    %c1 = arith.constant 1 : index
    %c0_2 = arith.constant 0 : index
    %c0_3 = arith.constant 0 : index
    %2 = vector.load %arg1[%c1, %c0_2, %c0_3] : memref<4x8x128xbf16, #tpu.memory_space<vmem>>, vector<1x8x128xbf16>
    %3 = vector.shape_cast %2 : vector<1x8x128xbf16> to vector<8x128xbf16>
    %4 = arith.maximumf %1, %3 : vector<8x128xbf16>
    %c2 = arith.constant 2 : index
    %c0_4 = arith.constant 0 : index
    %c0_5 = arith.constant 0 : index
    %5 = vector.load %arg1[%c2, %c0_4, %c0_5] : memref<4x8x128xbf16, #tpu.memory_space<vmem>>, vector<1x8x128xbf16>
    %6 = vector.shape_cast %5 : vector<1x8x128xbf16> to vector<8x128xbf16>
    %7 = arith.maximumf %4, %6 : vector<8x128xbf16>
    %c3 = arith.constant 3 : index
    %c0_6 = arith.constant 0 : index
    %c0_7 = arith.constant 0 : index
    %8 = vector.load %arg1[%c3, %c0_6, %c0_7] : memref<4x8x128xbf16, #tpu.memory_space<vmem>>, vector<1x8x128xbf16>
    %9 = vector.shape_cast %8 : vector<1x8x128xbf16> to vector<8x128xbf16>
    %10 = arith.maximumf %7, %9 : vector<8x128xbf16>
    %c0_8 = arith.constant 0 : index
    %c0_9 = arith.constant 0 : index
    %11 = vector.load %arg2[%c0_8, %c0_9] : memref<8x128xbf16, #tpu.memory_space<vmem>>, vector<8x128xbf16>
    tpu.vector_store %arg2[%c0_8, %c0_9], %10 {strides = array<i32>} : memref<8x128xbf16, #tpu.memory_space<vmem>>, vector<8x128xbf16>,
    return
  }
  func.func @transform_0(%arg0: i32) -> (i32, i32, i32) {
    %c0_i32 = arith.constant 0 : i32
    %c0_i32_0 = arith.constant 0 : i32
    %c0_i32_1 = arith.constant 0 : i32
    return %c0_i32, %c0_i32_0, %arg0 : i32, i32, i32
  }
  func.func @transform_1(%arg0: i32) -> (i32, i32) {
    %c0_i32 = arith.constant 0 : i32
    %c0_i32_0 = arith.constant 0 : i32
    return %c0_i32, %arg0 : i32, i32
  }
}

module attributes {stable_mosaic.version = 11 : i64} {
  func.func @_conv_kernel(%arg0: i32, %arg1: memref<72x128xbf16, #tpu.memory_space<vmem>>, %arg2: memref<16x72xbf16, #tpu.memory_space<vmem>>, %arg3: memref<16x1xf32, #tpu.memory_space<vmem>>, %arg4: memref<16x128xbf16, #tpu.memory_space<vmem>>) attributes {dimension_semantics = [#tpu.dimension_semantics<parallel>], iteration_bounds = array<i64: 1>, scalar_prefetch = 0 : i64, scratch_operands = 0 : i64, tpu.core_type = #tpu.core_type<tc>, window_params = [{transform_indices = @transform_0, window_bounds = array<i64: 72, 128>}, {pipeline_mode = #tpu.pipeline_mode<synchronous>, transform_indices = @transform_1, window_bounds = array<i64: 16, 72>}, {pipeline_mode = #tpu.pipeline_mode<synchronous>, transform_indices = @transform_2, window_bounds = array<i64: 16, 1>}, {transform_indices = @transform_3, window_bounds = array<i64: 16, 128>}]} {
    %c0 = arith.constant 0 : index
    %c0_0 = arith.constant 0 : index
    %0 = vector.load %arg2[%c0, %c0_0] : memref<16x72xbf16, #tpu.memory_space<vmem>>, vector<16x72xbf16>
    %c0_1 = arith.constant 0 : index
    %c0_2 = arith.constant 0 : index
    %1 = vector.load %arg1[%c0_1, %c0_2] : memref<72x128xbf16, #tpu.memory_space<vmem>>, vector<72x128xbf16>
    %cst = arith.constant dense<0.000000e+00> : vector<16x128xf32>
    %2 = tpu.matmul %0, %1, %cst {dimension_numbers = #tpu.dot_dimension_numbers<[1], [0], [0], [1], [0, 0, 1, 1], [], []>} : vector<16x72xbf16>, vector<72x128xbf16>, vector<16x128xf32> -> vector<16x128xf32>
    %c0_3 = arith.constant 0 : index
    %c0_4 = arith.constant 0 : index
    %3 = vector.load %arg3[%c0_3, %c0_4] : memref<16x1xf32, #tpu.memory_space<vmem>>, vector<16x1xf32>
    %4 = vector.broadcast %3 : vector<16x1xf32> to vector<16x128xf32>
    %5 = arith.addf %2, %4 : vector<16x128xf32>
    %cst_5 = arith.constant 0.000000e+00 : f32
    %6 = vector.broadcast %cst_5 : f32 to vector<16x128xf32>
    %7 = arith.maximumf %5, %6 : vector<16x128xf32>
    %8 = arith.truncf %7 : vector<16x128xf32> to vector<16x128xbf16>
    %c0_6 = arith.constant 0 : index
    %c0_7 = arith.constant 0 : index
    %9 = vector.load %arg4[%c0_6, %c0_7] : memref<16x128xbf16, #tpu.memory_space<vmem>>, vector<16x128xbf16>
    tpu.vector_store %arg4[%c0_6, %c0_7], %8 {strides = array<i32>} : memref<16x128xbf16, #tpu.memory_space<vmem>>, vector<16x128xbf16>,
    return
  }
  func.func @transform_0(%arg0: i32) -> (i32, i32) {
    %c0_i32 = arith.constant 0 : i32
    %c0_i32_0 = arith.constant 0 : i32
    return %c0_i32, %arg0 : i32, i32
  }
  func.func @transform_1(%arg0: i32) -> (i32, i32) {
    %c0_i32 = arith.constant 0 : i32
    %c0_i32_0 = arith.constant 0 : i32
    %c0_i32_1 = arith.constant 0 : i32
    return %c0_i32, %c0_i32_0 : i32, i32
  }
  func.func @transform_2(%arg0: i32) -> (i32, i32) {
    %c0_i32 = arith.constant 0 : i32
    %c0_i32_0 = arith.constant 0 : i32
    %c0_i32_1 = arith.constant 0 : i32
    return %c0_i32, %c0_i32_0 : i32, i32
  }
  func.func @transform_3(%arg0: i32) -> (i32, i32) {
    %c0_i32 = arith.constant 0 : i32
    %c0_i32_0 = arith.constant 0 : i32
    return %c0_i32, %arg0 : i32, i32
  }
}

module attributes {stable_mosaic.version = 11 : i64} {
  func.func @_conv_kernel(%arg0: i32, %arg1: memref<144x128xbf16, #tpu.memory_space<vmem>>, %arg2: memref<16x144xbf16, #tpu.memory_space<vmem>>, %arg3: memref<16x1xf32, #tpu.memory_space<vmem>>, %arg4: memref<16x128xbf16, #tpu.memory_space<vmem>>) attributes {dimension_semantics = [#tpu.dimension_semantics<parallel>], iteration_bounds = array<i64: 1>, scalar_prefetch = 0 : i64, scratch_operands = 0 : i64, tpu.core_type = #tpu.core_type<tc>, window_params = [{transform_indices = @transform_0, window_bounds = array<i64: 144, 128>}, {pipeline_mode = #tpu.pipeline_mode<synchronous>, transform_indices = @transform_1, window_bounds = array<i64: 16, 144>}, {pipeline_mode = #tpu.pipeline_mode<synchronous>, transform_indices = @transform_2, window_bounds = array<i64: 16, 1>}, {transform_indices = @transform_3, window_bounds = array<i64: 16, 128>}]} {
    %c0 = arith.constant 0 : index
    %c0_0 = arith.constant 0 : index
    %0 = vector.load %arg2[%c0, %c0_0] : memref<16x144xbf16, #tpu.memory_space<vmem>>, vector<16x144xbf16>
    %c0_1 = arith.constant 0 : index
    %c0_2 = arith.constant 0 : index
    %1 = vector.load %arg1[%c0_1, %c0_2] : memref<144x128xbf16, #tpu.memory_space<vmem>>, vector<144x128xbf16>
    %cst = arith.constant dense<0.000000e+00> : vector<16x128xf32>
    %2 = tpu.matmul %0, %1, %cst {dimension_numbers = #tpu.dot_dimension_numbers<[1], [0], [0], [1], [0, 0, 1, 1], [], []>} : vector<16x144xbf16>, vector<144x128xbf16>, vector<16x128xf32> -> vector<16x128xf32>
    %c0_3 = arith.constant 0 : index
    %c0_4 = arith.constant 0 : index
    %3 = vector.load %arg3[%c0_3, %c0_4] : memref<16x1xf32, #tpu.memory_space<vmem>>, vector<16x1xf32>
    %4 = vector.broadcast %3 : vector<16x1xf32> to vector<16x128xf32>
    %5 = arith.addf %2, %4 : vector<16x128xf32>
    %cst_5 = arith.constant 0.000000e+00 : f32
    %6 = vector.broadcast %cst_5 : f32 to vector<16x128xf32>
    %7 = arith.maximumf %5, %6 : vector<16x128xf32>
    %8 = arith.truncf %7 : vector<16x128xf32> to vector<16x128xbf16>
    %c0_6 = arith.constant 0 : index
    %c0_7 = arith.constant 0 : index
    %9 = vector.load %arg4[%c0_6, %c0_7] : memref<16x128xbf16, #tpu.memory_space<vmem>>, vector<16x128xbf16>
    tpu.vector_store %arg4[%c0_6, %c0_7], %8 {strides = array<i32>} : memref<16x128xbf16, #tpu.memory_space<vmem>>, vector<16x128xbf16>,
    return
  }
  func.func @transform_0(%arg0: i32) -> (i32, i32) {
    %c0_i32 = arith.constant 0 : i32
    %c0_i32_0 = arith.constant 0 : i32
    return %c0_i32, %arg0 : i32, i32
  }
  func.func @transform_1(%arg0: i32) -> (i32, i32) {
    %c0_i32 = arith.constant 0 : i32
    %c0_i32_0 = arith.constant 0 : i32
    %c0_i32_1 = arith.constant 0 : i32
    return %c0_i32, %c0_i32_0 : i32, i32
  }
  func.func @transform_2(%arg0: i32) -> (i32, i32) {
    %c0_i32 = arith.constant 0 : i32
    %c0_i32_0 = arith.constant 0 : i32
    %c0_i32_1 = arith.constant 0 : i32
    return %c0_i32, %c0_i32_0 : i32, i32
  }
  func.func @transform_3(%arg0: i32) -> (i32, i32) {
    %c0_i32 = arith.constant 0 : i32
    %c0_i32_0 = arith.constant 0 : i32
    return %c0_i32, %arg0 : i32, i32
  }
}

module attributes {stable_mosaic.version = 11 : i64} {
  func.func @_maxpool_kernel(%arg0: i32, %arg1: memref<2x16x128xbf16, #tpu.memory_space<vmem>>, %arg2: memref<16x128xbf16, #tpu.memory_space<vmem>>) attributes {dimension_semantics = [#tpu.dimension_semantics<parallel>], iteration_bounds = array<i64: 1>, scalar_prefetch = 0 : i64, scratch_operands = 0 : i64, tpu.core_type = #tpu.core_type<tc>, window_params = [{transform_indices = @transform_0, window_bounds = array<i64: 2, 16, 128>}, {transform_indices = @transform_1, window_bounds = array<i64: 16, 128>}]} {
    %c0 = arith.constant 0 : index
    %c0_0 = arith.constant 0 : index
    %c0_1 = arith.constant 0 : index
    %0 = vector.load %arg1[%c0, %c0_0, %c0_1] : memref<2x16x128xbf16, #tpu.memory_space<vmem>>, vector<1x16x128xbf16>
    %1 = vector.shape_cast %0 : vector<1x16x128xbf16> to vector<16x128xbf16>
    %c1 = arith.constant 1 : index
    %c0_2 = arith.constant 0 : index
    %c0_3 = arith.constant 0 : index
    %2 = vector.load %arg1[%c1, %c0_2, %c0_3] : memref<2x16x128xbf16, #tpu.memory_space<vmem>>, vector<1x16x128xbf16>
    %3 = vector.shape_cast %2 : vector<1x16x128xbf16> to vector<16x128xbf16>
    %4 = arith.maximumf %1, %3 : vector<16x128xbf16>
    %c0_4 = arith.constant 0 : index
    %c0_5 = arith.constant 0 : index
    %5 = vector.load %arg2[%c0_4, %c0_5] : memref<16x128xbf16, #tpu.memory_space<vmem>>, vector<16x128xbf16>
    tpu.vector_store %arg2[%c0_4, %c0_5], %4 {strides = array<i32>} : memref<16x128xbf16, #tpu.memory_space<vmem>>, vector<16x128xbf16>,
    return
  }
  func.func @transform_0(%arg0: i32) -> (i32, i32, i32) {
    %c0_i32 = arith.constant 0 : i32
    %c0_i32_0 = arith.constant 0 : i32
    %c0_i32_1 = arith.constant 0 : i32
    return %c0_i32, %c0_i32_0, %arg0 : i32, i32, i32
  }
  func.func @transform_1(%arg0: i32) -> (i32, i32) {
    %c0_i32 = arith.constant 0 : i32
    %c0_i32_0 = arith.constant 0 : i32
    return %c0_i32, %arg0 : i32, i32
  }
}

module attributes {stable_mosaic.version = 11 : i64} {
  func.func @_conv_stats_kernel(%arg0: i32, %arg1: memref<144x128xbf16, #tpu.memory_space<vmem>>, %arg2: memref<32x144xbf16, #tpu.memory_space<vmem>>, %arg3: memref<32x128xbf16, #tpu.memory_space<vmem>>, %arg4: memref<32x128xf32, #tpu.memory_space<vmem>>, %arg5: memref<32x128xf32, #tpu.memory_space<vmem>>) attributes {dimension_semantics = [#tpu.dimension_semantics<parallel>], iteration_bounds = array<i64: 1>, scalar_prefetch = 0 : i64, scratch_operands = 0 : i64, tpu.core_type = #tpu.core_type<tc>, window_params = [{transform_indices = @transform_0, window_bounds = array<i64: 144, 128>}, {pipeline_mode = #tpu.pipeline_mode<synchronous>, transform_indices = @transform_1, window_bounds = array<i64: 32, 144>}, {transform_indices = @transform_2, window_bounds = array<i64: 32, 128>}, {transform_indices = @transform_3, window_bounds = array<i64: 32, 128>}, {transform_indices = @transform_4, window_bounds = array<i64: 32, 128>}]} {
    %c0 = arith.constant 0 : index
    %c0_0 = arith.constant 0 : index
    %0 = vector.load %arg2[%c0, %c0_0] : memref<32x144xbf16, #tpu.memory_space<vmem>>, vector<32x144xbf16>
    %c0_1 = arith.constant 0 : index
    %c0_2 = arith.constant 0 : index
    %1 = vector.load %arg1[%c0_1, %c0_2] : memref<144x128xbf16, #tpu.memory_space<vmem>>, vector<144x128xbf16>
    %cst = arith.constant dense<0.000000e+00> : vector<32x128xf32>
    %2 = tpu.matmul %0, %1, %cst {dimension_numbers = #tpu.dot_dimension_numbers<[1], [0], [0], [1], [0, 0, 1, 1], [], []>} : vector<32x144xbf16>, vector<144x128xbf16>, vector<32x128xf32> -> vector<32x128xf32>
    %3 = arith.truncf %2 : vector<32x128xf32> to vector<32x128xbf16>
    %c0_3 = arith.constant 0 : index
    %c0_4 = arith.constant 0 : index
    %4 = vector.load %arg3[%c0_3, %c0_4] : memref<32x128xbf16, #tpu.memory_space<vmem>>, vector<32x128xbf16>
    tpu.vector_store %arg3[%c0_3, %c0_4], %3 {strides = array<i32>} : memref<32x128xbf16, #tpu.memory_space<vmem>>, vector<32x128xbf16>,
    %cst_5 = arith.constant dense<0.000000e+00> : vector<32xf32>
    %5 = vector.multi_reduction <add>, %2, %cst_5 [1] : vector<32x128xf32> to vector<32xf32>
    %6 = vector.shape_cast %5 : vector<32xf32> to vector<32x1xf32>
    %7 = arith.mulf %2, %2 : vector<32x128xf32>
    %cst_6 = arith.constant dense<0.000000e+00> : vector<32xf32>
    %8 = vector.multi_reduction <add>, %7, %cst_6 [1] : vector<32x128xf32> to vector<32xf32>
    %9 = vector.shape_cast %8 : vector<32xf32> to vector<32x1xf32>
    %10 = vector.shape_cast %6 : vector<32x1xf32> to vector<32x1xf32>
    %11 = vector.broadcast %10 : vector<32x1xf32> to vector<32x128xf32>
    %c0_7 = arith.constant 0 : index
    %c0_8 = arith.constant 0 : index
    %12 = vector.load %arg4[%c0_7, %c0_8] : memref<32x128xf32, #tpu.memory_space<vmem>>, vector<32x128xf32>
    tpu.vector_store %arg4[%c0_7, %c0_8], %11 {strides = array<i32>} : memref<32x128xf32, #tpu.memory_space<vmem>>, vector<32x128xf32>,
    %13 = vector.shape_cast %9 : vector<32x1xf32> to vector<32x1xf32>
    %14 = vector.broadcast %13 : vector<32x1xf32> to vector<32x128xf32>
    %c0_9 = arith.constant 0 : index
    %c0_10 = arith.constant 0 : index
    %15 = vector.load %arg5[%c0_9, %c0_10] : memref<32x128xf32, #tpu.memory_space<vmem>>, vector<32x128xf32>
    tpu.vector_store %arg5[%c0_9, %c0_10], %14 {strides = array<i32>} : memref<32x128xf32, #tpu.memory_space<vmem>>, vector<32x128xf32>,
    return
  }
  func.func @transform_0(%arg0: i32) -> (i32, i32) {
    %c0_i32 = arith.constant 0 : i32
    %c0_i32_0 = arith.constant 0 : i32
    return %c0_i32, %arg0 : i32, i32
  }
  func.func @transform_1(%arg0: i32) -> (i32, i32) {
    %c0_i32 = arith.constant 0 : i32
    %c0_i32_0 = arith.constant 0 : i32
    %c0_i32_1 = arith.constant 0 : i32
    return %c0_i32, %c0_i32_0 : i32, i32
  }
  func.func @transform_2(%arg0: i32) -> (i32, i32) {
    %c0_i32 = arith.constant 0 : i32
    %c0_i32_0 = arith.constant 0 : i32
    return %c0_i32, %arg0 : i32, i32
  }
  func.func @transform_3(%arg0: i32) -> (i32, i32) {
    %c0_i32 = arith.constant 0 : i32
    %c0_i32_0 = arith.constant 0 : i32
    return %c0_i32, %arg0 : i32, i32
  }
  func.func @transform_4(%arg0: i32) -> (i32, i32) {
    %c0_i32 = arith.constant 0 : i32
    %c0_i32_0 = arith.constant 0 : i32
    return %c0_i32, %arg0 : i32, i32
  }
}

module attributes {stable_mosaic.version = 11 : i64} {
  func.func @_conv_stats_kernel(%arg0: i32, %arg1: memref<288x128xbf16, #tpu.memory_space<vmem>>, %arg2: memref<32x288xbf16, #tpu.memory_space<vmem>>, %arg3: memref<32x128xbf16, #tpu.memory_space<vmem>>, %arg4: memref<32x128xf32, #tpu.memory_space<vmem>>, %arg5: memref<32x128xf32, #tpu.memory_space<vmem>>) attributes {dimension_semantics = [#tpu.dimension_semantics<parallel>], iteration_bounds = array<i64: 1>, scalar_prefetch = 0 : i64, scratch_operands = 0 : i64, tpu.core_type = #tpu.core_type<tc>, window_params = [{transform_indices = @transform_0, window_bounds = array<i64: 288, 128>}, {pipeline_mode = #tpu.pipeline_mode<synchronous>, transform_indices = @transform_1, window_bounds = array<i64: 32, 288>}, {transform_indices = @transform_2, window_bounds = array<i64: 32, 128>}, {transform_indices = @transform_3, window_bounds = array<i64: 32, 128>}, {transform_indices = @transform_4, window_bounds = array<i64: 32, 128>}]} {
    %c0 = arith.constant 0 : index
    %c0_0 = arith.constant 0 : index
    %0 = vector.load %arg2[%c0, %c0_0] : memref<32x288xbf16, #tpu.memory_space<vmem>>, vector<32x288xbf16>
    %c0_1 = arith.constant 0 : index
    %c0_2 = arith.constant 0 : index
    %1 = vector.load %arg1[%c0_1, %c0_2] : memref<288x128xbf16, #tpu.memory_space<vmem>>, vector<288x128xbf16>
    %cst = arith.constant dense<0.000000e+00> : vector<32x128xf32>
    %2 = tpu.matmul %0, %1, %cst {dimension_numbers = #tpu.dot_dimension_numbers<[1], [0], [0], [1], [0, 0, 1, 1], [], []>} : vector<32x288xbf16>, vector<288x128xbf16>, vector<32x128xf32> -> vector<32x128xf32>
    %3 = arith.truncf %2 : vector<32x128xf32> to vector<32x128xbf16>
    %c0_3 = arith.constant 0 : index
    %c0_4 = arith.constant 0 : index
    %4 = vector.load %arg3[%c0_3, %c0_4] : memref<32x128xbf16, #tpu.memory_space<vmem>>, vector<32x128xbf16>
    tpu.vector_store %arg3[%c0_3, %c0_4], %3 {strides = array<i32>} : memref<32x128xbf16, #tpu.memory_space<vmem>>, vector<32x128xbf16>,
    %cst_5 = arith.constant dense<0.000000e+00> : vector<32xf32>
    %5 = vector.multi_reduction <add>, %2, %cst_5 [1] : vector<32x128xf32> to vector<32xf32>
    %6 = vector.shape_cast %5 : vector<32xf32> to vector<32x1xf32>
    %7 = arith.mulf %2, %2 : vector<32x128xf32>
    %cst_6 = arith.constant dense<0.000000e+00> : vector<32xf32>
    %8 = vector.multi_reduction <add>, %7, %cst_6 [1] : vector<32x128xf32> to vector<32xf32>
    %9 = vector.shape_cast %8 : vector<32xf32> to vector<32x1xf32>
    %10 = vector.shape_cast %6 : vector<32x1xf32> to vector<32x1xf32>
    %11 = vector.broadcast %10 : vector<32x1xf32> to vector<32x128xf32>
    %c0_7 = arith.constant 0 : index
    %c0_8 = arith.constant 0 : index
    %12 = vector.load %arg4[%c0_7, %c0_8] : memref<32x128xf32, #tpu.memory_space<vmem>>, vector<32x128xf32>
    tpu.vector_store %arg4[%c0_7, %c0_8], %11 {strides = array<i32>} : memref<32x128xf32, #tpu.memory_space<vmem>>, vector<32x128xf32>,
    %13 = vector.shape_cast %9 : vector<32x1xf32> to vector<32x1xf32>
    %14 = vector.broadcast %13 : vector<32x1xf32> to vector<32x128xf32>
    %c0_9 = arith.constant 0 : index
    %c0_10 = arith.constant 0 : index
    %15 = vector.load %arg5[%c0_9, %c0_10] : memref<32x128xf32, #tpu.memory_space<vmem>>, vector<32x128xf32>
    tpu.vector_store %arg5[%c0_9, %c0_10], %14 {strides = array<i32>} : memref<32x128xf32, #tpu.memory_space<vmem>>, vector<32x128xf32>,
    return
  }
  func.func @transform_0(%arg0: i32) -> (i32, i32) {
    %c0_i32 = arith.constant 0 : i32
    %c0_i32_0 = arith.constant 0 : i32
    return %c0_i32, %arg0 : i32, i32
  }
  func.func @transform_1(%arg0: i32) -> (i32, i32) {
    %c0_i32 = arith.constant 0 : i32
    %c0_i32_0 = arith.constant 0 : i32
    %c0_i32_1 = arith.constant 0 : i32
    return %c0_i32, %c0_i32_0 : i32, i32
  }
  func.func @transform_2(%arg0: i32) -> (i32, i32) {
    %c0_i32 = arith.constant 0 : i32
    %c0_i32_0 = arith.constant 0 : i32
    return %c0_i32, %arg0 : i32, i32
  }
  func.func @transform_3(%arg0: i32) -> (i32, i32) {
    %c0_i32 = arith.constant 0 : i32
    %c0_i32_0 = arith.constant 0 : i32
    return %c0_i32, %arg0 : i32, i32
  }
  func.func @transform_4(%arg0: i32) -> (i32, i32) {
    %c0_i32 = arith.constant 0 : i32
    %c0_i32_0 = arith.constant 0 : i32
    return %c0_i32, %arg0 : i32, i32
  }
}

module attributes {stable_mosaic.version = 11 : i64} {
  func.func @_bn_relu_maxpool_kernel(%arg0: i32, %arg1: memref<2x32x128xbf16, #tpu.memory_space<vmem>>, %arg2: memref<32x1xf32, #tpu.memory_space<vmem>>, %arg3: memref<32x1xf32, #tpu.memory_space<vmem>>, %arg4: memref<32x128xbf16, #tpu.memory_space<vmem>>) attributes {dimension_semantics = [#tpu.dimension_semantics<parallel>], iteration_bounds = array<i64: 1>, scalar_prefetch = 0 : i64, scratch_operands = 0 : i64, tpu.core_type = #tpu.core_type<tc>, window_params = [{transform_indices = @transform_0, window_bounds = array<i64: 2, 32, 128>}, {pipeline_mode = #tpu.pipeline_mode<synchronous>, transform_indices = @transform_1, window_bounds = array<i64: 32, 1>}, {pipeline_mode = #tpu.pipeline_mode<synchronous>, transform_indices = @transform_2, window_bounds = array<i64: 32, 1>}, {transform_indices = @transform_3, window_bounds = array<i64: 32, 128>}]} {
    %c0 = arith.constant 0 : index
    %c0_0 = arith.constant 0 : index
    %0 = vector.load %arg2[%c0, %c0_0] : memref<32x1xf32, #tpu.memory_space<vmem>>, vector<32x1xf32>
    %c0_1 = arith.constant 0 : index
    %c0_2 = arith.constant 0 : index
    %1 = vector.load %arg3[%c0_1, %c0_2] : memref<32x1xf32, #tpu.memory_space<vmem>>, vector<32x1xf32>
    %c0_3 = arith.constant 0 : index
    %c0_4 = arith.constant 0 : index
    %c0_5 = arith.constant 0 : index
    %2 = vector.load %arg1[%c0_3, %c0_4, %c0_5] : memref<2x32x128xbf16, #tpu.memory_space<vmem>>, vector<1x32x128xbf16>
    %3 = vector.shape_cast %2 : vector<1x32x128xbf16> to vector<32x128xbf16>
    %4 = arith.extf %3 : vector<32x128xbf16> to vector<32x128xf32>
    %5 = vector.broadcast %0 : vector<32x1xf32> to vector<32x128xf32>
    %6 = arith.mulf %4, %5 : vector<32x128xf32>
    %7 = vector.broadcast %1 : vector<32x1xf32> to vector<32x128xf32>
    %8 = arith.addf %6, %7 : vector<32x128xf32>
    %cst = arith.constant 0.000000e+00 : f32
    %9 = vector.broadcast %cst : f32 to vector<32x128xf32>
    %10 = arith.maximumf %8, %9 : vector<32x128xf32>
    %c1 = arith.constant 1 : index
    %c0_6 = arith.constant 0 : index
    %c0_7 = arith.constant 0 : index
    %11 = vector.load %arg1[%c1, %c0_6, %c0_7] : memref<2x32x128xbf16, #tpu.memory_space<vmem>>, vector<1x32x128xbf16>
    %12 = vector.shape_cast %11 : vector<1x32x128xbf16> to vector<32x128xbf16>
    %13 = arith.extf %12 : vector<32x128xbf16> to vector<32x128xf32>
    %14 = vector.broadcast %0 : vector<32x1xf32> to vector<32x128xf32>
    %15 = arith.mulf %13, %14 : vector<32x128xf32>
    %16 = vector.broadcast %1 : vector<32x1xf32> to vector<32x128xf32>
    %17 = arith.addf %15, %16 : vector<32x128xf32>
    %cst_8 = arith.constant 0.000000e+00 : f32
    %18 = vector.broadcast %cst_8 : f32 to vector<32x128xf32>
    %19 = arith.maximumf %17, %18 : vector<32x128xf32>
    %20 = arith.maximumf %10, %19 : vector<32x128xf32>
    %21 = arith.truncf %20 : vector<32x128xf32> to vector<32x128xbf16>
    %c0_9 = arith.constant 0 : index
    %c0_10 = arith.constant 0 : index
    %22 = vector.load %arg4[%c0_9, %c0_10] : memref<32x128xbf16, #tpu.memory_space<vmem>>, vector<32x128xbf16>
    tpu.vector_store %arg4[%c0_9, %c0_10], %21 {strides = array<i32>} : memref<32x128xbf16, #tpu.memory_space<vmem>>, vector<32x128xbf16>,
    return
  }
  func.func @transform_0(%arg0: i32) -> (i32, i32, i32) {
    %c0_i32 = arith.constant 0 : i32
    %c0_i32_0 = arith.constant 0 : i32
    %c0_i32_1 = arith.constant 0 : i32
    return %c0_i32, %c0_i32_0, %arg0 : i32, i32, i32
  }
  func.func @transform_1(%arg0: i32) -> (i32, i32) {
    %c0_i32 = arith.constant 0 : i32
    %c0_i32_0 = arith.constant 0 : i32
    %c0_i32_1 = arith.constant 0 : i32
    return %c0_i32, %c0_i32_0 : i32, i32
  }
  func.func @transform_2(%arg0: i32) -> (i32, i32) {
    %c0_i32 = arith.constant 0 : i32
    %c0_i32_0 = arith.constant 0 : i32
    %c0_i32_1 = arith.constant 0 : i32
    return %c0_i32, %c0_i32_0 : i32, i32
  }
  func.func @transform_3(%arg0: i32) -> (i32, i32) {
    %c0_i32 = arith.constant 0 : i32
    %c0_i32_0 = arith.constant 0 : i32
    return %c0_i32, %arg0 : i32, i32
  }
}

module attributes {stable_mosaic.version = 11 : i64} {
  func.func @_conv_kernel(%arg0: i32, %arg1: memref<128x128xbf16, #tpu.memory_space<vmem>>, %arg2: memref<32x128xbf16, #tpu.memory_space<vmem>>, %arg3: memref<32x1xf32, #tpu.memory_space<vmem>>, %arg4: memref<32x128xbf16, #tpu.memory_space<vmem>>) attributes {dimension_semantics = [#tpu.dimension_semantics<parallel>], iteration_bounds = array<i64: 1>, scalar_prefetch = 0 : i64, scratch_operands = 0 : i64, tpu.core_type = #tpu.core_type<tc>, window_params = [{transform_indices = @transform_0, window_bounds = array<i64: 128, 128>}, {pipeline_mode = #tpu.pipeline_mode<synchronous>, transform_indices = @transform_1, window_bounds = array<i64: 32, 128>}, {pipeline_mode = #tpu.pipeline_mode<synchronous>, transform_indices = @transform_2, window_bounds = array<i64: 32, 1>}, {transform_indices = @transform_3, window_bounds = array<i64: 32, 128>}]} {
    %c0 = arith.constant 0 : index
    %c0_0 = arith.constant 0 : index
    %0 = vector.load %arg2[%c0, %c0_0] : memref<32x128xbf16, #tpu.memory_space<vmem>>, vector<32x128xbf16>
    %c0_1 = arith.constant 0 : index
    %c0_2 = arith.constant 0 : index
    %1 = vector.load %arg1[%c0_1, %c0_2] : memref<128x128xbf16, #tpu.memory_space<vmem>>, vector<128x128xbf16>
    %cst = arith.constant dense<0.000000e+00> : vector<32x128xf32>
    %2 = tpu.matmul %0, %1, %cst {dimension_numbers = #tpu.dot_dimension_numbers<[1], [0], [0], [1], [0, 0, 1, 1], [], []>} : vector<32x128xbf16>, vector<128x128xbf16>, vector<32x128xf32> -> vector<32x128xf32>
    %c0_3 = arith.constant 0 : index
    %c0_4 = arith.constant 0 : index
    %3 = vector.load %arg3[%c0_3, %c0_4] : memref<32x1xf32, #tpu.memory_space<vmem>>, vector<32x1xf32>
    %4 = vector.broadcast %3 : vector<32x1xf32> to vector<32x128xf32>
    %5 = arith.addf %2, %4 : vector<32x128xf32>
    %cst_5 = arith.constant 0.000000e+00 : f32
    %6 = vector.broadcast %cst_5 : f32 to vector<32x128xf32>
    %7 = arith.maximumf %5, %6 : vector<32x128xf32>
    %8 = arith.truncf %7 : vector<32x128xf32> to vector<32x128xbf16>
    %c0_6 = arith.constant 0 : index
    %c0_7 = arith.constant 0 : index
    %9 = vector.load %arg4[%c0_6, %c0_7] : memref<32x128xbf16, #tpu.memory_space<vmem>>, vector<32x128xbf16>
    tpu.vector_store %arg4[%c0_6, %c0_7], %8 {strides = array<i32>} : memref<32x128xbf16, #tpu.memory_space<vmem>>, vector<32x128xbf16>,
    return
  }
  func.func @transform_0(%arg0: i32) -> (i32, i32) {
    %c0_i32 = arith.constant 0 : i32
    %c0_i32_0 = arith.constant 0 : i32
    return %c0_i32, %arg0 : i32, i32
  }
  func.func @transform_1(%arg0: i32) -> (i32, i32) {
    %c0_i32 = arith.constant 0 : i32
    %c0_i32_0 = arith.constant 0 : i32
    %c0_i32_1 = arith.constant 0 : i32
    return %c0_i32, %c0_i32_0 : i32, i32
  }
  func.func @transform_2(%arg0: i32) -> (i32, i32) {
    %c0_i32 = arith.constant 0 : i32
    %c0_i32_0 = arith.constant 0 : i32
    %c0_i32_1 = arith.constant 0 : i32
    return %c0_i32, %c0_i32_0 : i32, i32
  }
  func.func @transform_3(%arg0: i32) -> (i32, i32) {
    %c0_i32 = arith.constant 0 : i32
    %c0_i32_0 = arith.constant 0 : i32
    return %c0_i32, %arg0 : i32, i32
  }
}

</mosaic_0001>

<llo_original>
// kernel: vgg_forward.11
$region0: #{vgg_forward.11}
  #allocation0 [shape = 'u32[]', space=smem, size = 0x4, offset = 0x4, fixed_abs, tag = 'smem constant byte address 0x4 - core index']
  #allocation1 [shape = 'u32[72,128]{1,0:T(1,128)}', space=vmem, size = 0x9000, scoped, tag = 'internal scratch']
  %s0 = inlined_call_operand.vmem [shape: bf16[9,2048], index: 0, kind: input, shape index: {}]
  %s1 = inlined_call_operand.vmem [shape: bf16[4,9], index: 1, kind: input, shape index: {}]
  %s2 = inlined_call_operand.vmem [shape: f32[4,1], index: 2, kind: input, shape index: {}]
  %s3 = inlined_call_operand.vmem [shape: bf16[4,2048], index: 3, kind: output, shape index: {}]
  %s4 = sld [smem:[#allocation0]]
  $region68: #{vgg_forward.11} parent=0
    _
  %s6 = ssub.s32 1, %s4
  %s7 = scalar_select 0, %s6, %s4
  $region1: #{vgg_forward.11} parent=0
    #allocation2 [shape = 'u8[32768]{0}', space=vmem, size = 0x8000, scoped, tag = 'input window, operand 0']
    loop: start=0, step=1, limit=6
    $region2: #{vgg_forward.11} parent=1 // loop_pre_header
      _
    $region3: #{vgg_forward.11} parent=1 // loop_header
      %s9 = sphi 0, %s13
      %p10 = scmp.ge.s32.totalorder %s9, 6
      %s19 = sphi 0, %s21
      %s22 = sphi 0, %s19
      %s23 = sphi 0, %s22
      %s39 = sphi 0, %s23
      %s43 = sphi 0, %s43
      %s45 = sphi 0, %s43
      %s46 = sphi 0, %s45
      %s60 = sphi 0, %s46
      %s64 = sphi 0, %s64
      %s66 = sphi 0, %s64
      %s67 = sphi 0, %s66
      %s81 = sphi 0, %s67
      %s87 = sphi 0, %s89
      %s90 = sphi 0, %s87
      %s91 = sphi 0, %s90
      %s107 = sphi 0, %s91
    $region4: #{vgg_forward.11} parent=1 // loop_header_branch
      %12 = sbr.rel (%p10) target = $region8
    $region5: #{vgg_forward.11} parent=1 // loop_body
      %s14 = ssub.s32 %s9, 1
      %s15 = ssub.s32 %s9, 2
      %s16 = sadd.s32 %s9, 1
      %s17 = ssub.s32 %s9, %s16
      %p18 = scmp.eq.s32.totalorder %s17, 0
      %s20 = sadd.s32 %s19, 1
      %s21 = scalar_select %p18, %s19, %s20
      %p24 = pneg %p18
      %p25 = scmp.eq.s32.totalorder %s9, 3
      %p26 = por %p24, %p25
      %p27 = scmp.ne.s32.totalorder %s19, %s22
      %p28 = scmp.eq.s32.totalorder %s9, 0
      %p29 = por %p27, %p28
      %p30 = scmp.ne.s32.totalorder %s19, %s22
      %p31 = scmp.eq.s32.totalorder %s14, 3
      %p32 = por %p30, %p31
      %p33 = scmp.ne.s32.totalorder %s22, %s23
      %p34 = scmp.eq.s32.totalorder %s14, 0
      %p35 = por %p33, %p34
      %p36 = scmp.ne.s32.totalorder %s22, %s23
      %p37 = scmp.eq.s32.totalorder %s15, 3
      %p38 = por %p36, %p37
      %p40 = scmp.ne.s32.totalorder %s23, %s39
      %p41 = scmp.eq.s32.totalorder %s15, 0
      %p42 = por %p40, %p41
      %s44 = sadd.s32 %s43, 1
      %p47 = scmp.eq.s32.totalorder %s9, 3
      %p48 = scmp.ne.s32.totalorder %s43, %s45
      %p49 = scmp.eq.s32.totalorder %s9, 0
      %p50 = por %p48, %p49
      %p51 = scmp.ne.s32.totalorder %s43, %s45
      %p52 = scmp.eq.s32.totalorder %s14, 3
      %p53 = por %p51, %p52
      %p54 = scmp.ne.s32.totalorder %s45, %s46
      %p55 = scmp.eq.s32.totalorder %s14, 0
      %p56 = por %p54, %p55
      %p57 = scmp.ne.s32.totalorder %s45, %s46
      %p58 = scmp.eq.s32.totalorder %s15, 3
      %p59 = por %p57, %p58
      %p61 = scmp.ne.s32.totalorder %s46, %s60
      %p62 = scmp.eq.s32.totalorder %s15, 0
      %p63 = por %p61, %p62
      %s65 = sadd.s32 %s64, 1
      %p68 = scmp.eq.s32.totalorder %s9, 3
      %p69 = scmp.ne.s32.totalorder %s64, %s66
      %p70 = scmp.eq.s32.totalorder %s9, 0
      %p71 = por %p69, %p70
      %p72 = scmp.ne.s32.totalorder %s64, %s66
      %p73 = scmp.eq.s32.totalorder %s14, 3
      %p74 = por %p72, %p73
      %p75 = scmp.ne.s32.totalorder %s66, %s67
      %p76 = scmp.eq.s32.totalorder %s14, 0
      %p77 = por %p75, %p76
      %p78 = scmp.ne.s32.totalorder %s66, %s67
      %p79 = scmp.eq.s32.totalorder %s15, 3
      %p80 = por %p78, %p79
      %p82 = scmp.ne.s32.totalorder %s67, %s81
      %p83 = scmp.eq.s32.totalorder %s15, 0
      %p84 = por %p82, %p83
      %s85 = ssub.s32 %s9, %s16
      %p86 = scmp.eq.s32.totalorder %s85, 0
      %s88 = sadd.s32 %s87, 1
      %s89 = scalar_select %p86, %s87, %s88
      %p92 = pneg %p86
      %p93 = scmp.eq.s32.totalorder %s9, 3
      %p94 = por %p92, %p93
      %p95 = scmp.ne.s32.totalorder %s87, %s90
      %p96 = scmp.eq.s32.totalorder %s9, 0
      %p97 = por %p95, %p96
      %p98 = scmp.ne.s32.totalorder %s87, %s90
      %p99 = scmp.eq.s32.totalorder %s14, 3
      %p100 = por %p98, %p99
      %p101 = scmp.ne.s32.totalorder %s90, %s91
      %p102 = scmp.eq.s32.totalorder %s14, 0
      %p103 = por %p101, %p102
      %p104 = scmp.ne.s32.totalorder %s90, %s91
      %p105 = scmp.eq.s32.totalorder %s15, 3
      %p106 = por %p104, %p105
      %p108 = scmp.ne.s32.totalorder %s91, %s107
      %p109 = scmp.eq.s32.totalorder %s15, 0
      %p110 = por %p108, %p109
      %p111 = scmp.le.s32.totalorder 1, %s9
      %p112 = scmp.lt.s32.totalorder %s9, 5
      %p113 = pnand %p111, %p112
      %p114 = pneg %p113
      // Predicated region
      $region9: #{vgg_forward.11} parent=5 // pred_check
        _
      $region10: #{vgg_forward.11} parent=5 // pred_check_branch
        %116 = sbr.rel (%p113) target = $region12
      $region11: #{vgg_forward.11} parent=5 // pred_region
        %s117 = ssub.s32 %s9, 1
        // Predicated region
        $region13: #{vgg_forward.11} parent=11 // pred_check
          %p118 = pneg %p56
        $region14: #{vgg_forward.11} parent=11 // pred_check_branch
          %120 = sbr.rel (%p118) target = $region16
        $region15: #{vgg_forward.11} parent=11 // pred_region
          _
        $region16: #{vgg_forward.11} parent=11 // pred_fallthru
          _
        // Predicated region
        $region17: #{vgg_forward.11} parent=11 // pred_check
          %p121 = pneg %p77
        $region18: #{vgg_forward.11} parent=11 // pred_check_branch
          %123 = sbr.rel (%p121) target = $region20
        $region19: #{vgg_forward.11} parent=11 // pred_region
          _
        $region20: #{vgg_forward.11} parent=11 // pred_fallthru
          _
      $region12: #{vgg_forward.11} parent=5 // pred_fallthru
        _
      %p124 = scmp.lt.s32.totalorder %s9, 4
      // Predicated region
      $region21: #{vgg_forward.11} parent=5 // pred_check
        %p125 = pneg %p124
      $region22: #{vgg_forward.11} parent=5 // pred_check_branch
        %127 = sbr.rel (%p125) target = $region24
      $region23: #{vgg_forward.11} parent=5 // pred_region
        // Predicated region
        $region25: #{vgg_forward.11} parent=23 // pred_check
          %p128 = pneg %p29
        $region26: #{vgg_forward.11} parent=23 // pred_check_branch
          %130 = sbr.rel (%p128) target = $region28
        $region27: #{vgg_forward.11} parent=23 // pred_region
          %s131 = sand.u32 %s19, 1
          %s132 = sand.u32 %s19, 1
          %s133 = smul.addr %s132, 32
          %s134 = scalar_lea.vmem [#allocation2], %s133
          %s135 = smul.u32 4, %s9
          %s136 = smul.addr %s135, 4
          %s137 = scalar_lea.vmem %s0, %s136
          // Predicated region
          $region29: #{vgg_forward.11} parent=27 // pred_check
            _
          $region30: #{vgg_forward.11} parent=27 // pred_check_branch
            %139 = sbr.rel (0) target = $region32
          $region31: #{vgg_forward.11} parent=27 // pred_region
            // Predicated region
            $region33: #{vgg_forward.11} parent=31 // pred_check
              _
            $region34: #{vgg_forward.11} parent=31 // pred_check_branch
              %141 = sbr.rel (0) target = $region36
            $region35: #{vgg_forward.11} parent=31 // pred_region
              loop: start=0, step=1, limit=1
              $region37: #{vgg_forward.11} parent=35 // loop_pre_header
                _
              $region38: #{vgg_forward.11} parent=35 // loop_header
                %s143 = sphi 0, %s147
                %p144 = scmp.ge.s32.totalorder %s143, 1
                %s148 = sphi %s137, %s137
                %s149 = sphi %s134, %s134
              $region39: #{vgg_forward.11} parent=35 // loop_header_branch
                %146 = sbr.rel (%p144) target = $region43
              $region40: #{vgg_forward.11} parent=35 // loop_body
                %v150 = vld [vmem:[%s148] sm:$0xff]
                %151 = vst [vmem:[%s149] sm:$0xff] %v150
                %v152 = vld [vmem:[%s148 + $0x8] sm:$0xff]
                %153 = vst [vmem:[%s149 + $0x8] sm:$0xff] %v152
                %v154 = vld [vmem:[%s148 + $0x40] sm:$0xff]
                %155 = vst [vmem:[%s149 + $0x10] sm:$0xff] %v154
                %v156 = vld [vmem:[%s148 + $0x48] sm:$0xff]
                %157 = vst [vmem:[%s149 + $0x18] sm:$0xff] %v156
              $region41: #{vgg_forward.11} parent=35 // loop_footer
                %s147 = sadd.s32 1, %s143
              $region42: #{vgg_forward.11} parent=35 // loop_footer_branch
                %142 = sbr.rel target = $region38
              $region43: #{vgg_forward.11} parent=35 // loop_exit
                _
            $region36: #{vgg_forward.11} parent=31 // pred_fallthru
              _
            // Predicated region
            $region44: #{vgg_forward.11} parent=31 // pred_check
              _
            $region45: #{vgg_forward.11} parent=31 // pred_check_branch
              %159 = sbr.rel target = $region47
            $region46: #{vgg_forward.11} parent=31 // pred_region
              _
            $region47: #{vgg_forward.11} parent=31 // pred_fallthru
              _
          $region32: #{vgg_forward.11} parent=27 // pred_fallthru
            _
          %160 = vnop
        $region28: #{vgg_forward.11} parent=23 // pred_fallthru
          _
      $region24: #{vgg_forward.11} parent=5 // pred_fallthru
        _
      %p161 = scmp.le.s32.totalorder 1, %s9
      %p162 = scmp.lt.s32.totalorder %s9, 5
      %p163 = pnand %p161, %p162
      %p164 = pneg %p163
      // Predicated region
      $region48: #{vgg_forward.11} parent=5 // pred_check
        _
      $region49: #{vgg_forward.11} parent=5 // pred_check_branch
        %166 = sbr.rel (%p163) target = $region51
      $region50: #{vgg_forward.11} parent=5 // pred_region
        %s167 = ssub.s32 %s9, 1
        %s168 = sand.u32 %s22, 1
        %s169 = sand.u32 %s22, 1
        %s170 = smul.addr %s169, 32
        %s171 = scalar_lea.vmem [#allocation2], %s170
        // Predicated region
        $region52: #{vgg_forward.11} parent=50 // pred_check
          %p172 = pneg %p35
        $region53: #{vgg_forward.11} parent=50 // pred_check_branch
          %174 = sbr.rel (%p172) target = $region55
        $region54: #{vgg_forward.11} parent=50 // pred_region
          _
        $region55: #{vgg_forward.11} parent=50 // pred_fallthru
          _
        %s175 = sand.u32 %s22, 1
        %s176 = sand.u32 %s22, 1
        %s177 = smul.addr %s176, 32
        %s178 = scalar_lea.vmem [#allocation2], %s177
        %p179 = pneg %p35
        %p180 = pneg %p32
        %p181 = pneg %p56
        %p182 = pneg %p53
        %p183 = pneg %p77
        %p184 = pneg %p74
        %p185 = pneg %p103
        %p186 = pneg %p100
        %s187 = smul.u32 4, %s14
        %p188 = scmp.lt.s32.totalorder %s187, 15
        %s189 = scalar_select %p188, %s187, 15
        %s190 = smul.addr %s189, 2
        %s191 = scalar_lea.vmem %s3, %s190
        %s192 = smul.u32 4, %s14
        %s193 = smul.u32 4, %s14
        %p194 = scmp.lt.s32.totalorder %s193, 15
        %s195 = scalar_select %p194, %s193, 15
        %s196 = smul.addr %s195, 2
        %s197 = scalar_lea.vmem %s3, %s196
        %s198 = smul.u32 4, %s14
        %v200 = vld [vmem:[%s1] sm:$0x3]
        %v201 = vld [vmem:[%s171] sm:$0xff]
        %v202 = vld [vmem:[%s171 + $0x8] sm:$0xff]
        %v203 = vld [vmem:[%s171 + $0x10] sm:$0x11]
        %v204 = vld [vmem:[%s171 + $0x18] sm:$0x11]
        %v205 = vld [vmem:[%s2] sm:$0xf]
        %207 = vset.pattern.permute.xlu0 0
        %208 = vperm.xlu0 %207, %v205
        %v209 = vpop.permute.xlu0 %208
        %v215 = vunpack.c.l.b16 %v201
        %v216 = vunpack.c.h.b16 %v201
        %v217 = vunpack.c.l.b16 %v202
        %v218 = vunpack.c.h.b16 %v202
        %v219 = vunpack.c.l.b16 %v203
        %v220 = vunpack.c.h.b16 %v203
        %v221 = vunpack.c.l.b16 %v204
        %v222 = vunpack.c.h.b16 %v204
        %v223 = vpack.c.b16 %v219, %v215
        %v224 = vpack.c.b16 %v220, %v216
        %v225 = vpack.c.b16 %v221, %v217
        %v226 = vpack.c.b16 %v222, %v218
        %vm227 = vcmask 72704
        %v229 = vsel %vm227, %v200, 0
        %vm231 = vcmask 1043456
        %vm232 = vcmask 1044480
        %v233 = vsel %vm231, 4294967295, 65535
        %v234 = vsel %vm232, %v233, 0
        %v236 = vand.u32 %v223, %v234
        %v239 = vand.u32 %v224, %v234
        %v242 = vand.u32 %v225, %v234
        %v245 = vand.u32 %v226, %v234
        %247 = vmatpush.bf16.msra.mxu0 0
        %248 = vmatpush.bf16.msra.mxu0 0
        %249 = vmatpush.bf16.msra.mxu0 0
        %250 = vmatpush.bf16.msra.mxu0 0
        %251 = vmatpush.bf16.msra.mxu0 0
        %252 = vmatpush.bf16.msra.mxu0 0
        %253 = vmatpush.bf16.msra.mxu0 0
        %254 = vmatpush.bf16.msra.mxu0 %v236
        %255 = vmatmul.bf16.gmra.mxu0 %v229
        %v256 = vpop.f32.mrf.mxu0
        %v257 = vadd.f32 %v209, %v256
        %v258 = vpop.f32.mrf.mxu0
        %259 = vdwg.mxu0
        %260 = vmatpush.bf16.msra.mxu0 0
        %261 = vmatpush.bf16.msra.mxu0 0
        %262 = vmatpush.bf16.msra.mxu0 0
        %263 = vmatpush.bf16.msra.mxu0 0
        %264 = vmatpush.bf16.msra.mxu0 0
        %265 = vmatpush.bf16.msra.mxu0 0
        %266 = vmatpush.bf16.msra.mxu0 0
        %267 = vmatpush.bf16.msra.mxu0 %v239
        %268 = vmatmul.bf16.gmra.mxu0 %v229
        %v269 = vpop.f32.mrf.mxu0
        %v270 = vadd.f32 %v209, %v269
        %v271 = vpop.f32.mrf.mxu0
        %272 = vdwg.mxu0
        %273 = vmatpush.bf16.msra.mxu0 0
        %274 = vmatpush.bf16.msra.mxu0 0
        %275 = vmatpush.bf16.msra.mxu0 0
        %276 = vmatpush.bf16.msra.mxu0 0
        %277 = vmatpush.bf16.msra.mxu0 0
        %278 = vmatpush.bf16.msra.mxu0 0
        %279 = vmatpush.bf16.msra.mxu0 0
        %280 = vmatpush.bf16.msra.mxu0 %v242
        %281 = vmatmul.bf16.gmra.mxu0 %v229
        %v282 = vpop.f32.mrf.mxu0
        %v283 = vadd.f32 %v209, %v282
        %v284 = vpop.f32.mrf.mxu0
        %285 = vdwg.mxu0
        %286 = vmatpush.bf16.msra.mxu0 0
        %287 = vmatpush.bf16.msra.mxu0 0
        %288 = vmatpush.bf16.msra.mxu0 0
        %289 = vmatpush.bf16.msra.mxu0 0
        %290 = vmatpush.bf16.msra.mxu0 0
        %291 = vmatpush.bf16.msra.mxu0 0
        %292 = vmatpush.bf16.msra.mxu0 0
        %293 = vmatpush.bf16.msra.mxu0 %v245
        %294 = vmatmul.bf16.gmra.mxu0 %v229
        %v295 = vpop.f32.mrf.mxu0
        %v296 = vadd.f32 %v209, %v295
        %v297 = vpop.f32.mrf.mxu0
        %298 = vdwg.mxu0
        %v299 = vmax.f32 %v257, 0.0
        %v300 = vmax.f32 %v270, 0.0
        %v301 = vmax.f32 %v283, 0.0
        %v302 = vmax.f32 %v296, 0.0
        %v303 = vpack.c.bf16 %v300, %v299
        %v304 = vpack.c.bf16 %v302, %v301
        %v307 = vrot.slane %v303, 2
        %v308 = vrot.slane %v304, 4
        %v309 = vrot.slane %v304, 6
        %vm310 = vcmask 1041408
        %v313 = vsel %vm310, %v303, %v307
        %vm314 = vcmask 1045508
        %v317 = vsel %vm314, %v308, %v309
        %v318 = vsel %vm231, %v313, %v317
        %320 = vst [vmem:[%s197] sm:$0xff] %v318
        %s321 = smul.u32 4, %s14
        %p322 = scmp.lt.s32.totalorder %s321, 15
        %s323 = scalar_select %p322, %s321, 15
        %s324 = smul.addr %s323, 2
        %s325 = scalar_lea.vmem %s3, %s324
        // Predicated region
        $region56: #{vgg_forward.11} parent=50 // pred_check
          %p326 = pneg %p100
        $region57: #{vgg_forward.11} parent=50 // pred_check_branch
          %328 = sbr.rel (%p326) target = $region59
        $region58: #{vgg_forward.11} parent=50 // pred_region
          %s329 = smul.u32 4, %s14
        $region59: #{vgg_forward.11} parent=50 // pred_fallthru
          _
      $region51: #{vgg_forward.11} parent=5 // pred_fallthru
        _
      %p330 = scmp.le.s32.totalorder 2, %s9
      // Predicated region
      $region60: #{vgg_forward.11} parent=5 // pred_check
        %p331 = pneg %p330
      $region61: #{vgg_forward.11} parent=5 // pred_check_branch
        %333 = sbr.rel (%p331) target = $region63
      $region62: #{vgg_forward.11} parent=5 // pred_region
        %s334 = ssub.s32 %s9, 2
        // Predicated region
        $region64: #{vgg_forward.11} parent=62 // pred_check
          %p335 = pneg %p106
        $region65: #{vgg_forward.11} parent=62 // pred_check_branch
          %337 = sbr.rel (%p335) target = $region67
        $region66: #{vgg_forward.11} parent=62 // pred_region
          %s338 = smul.u32 4, %s15
          %p339 = scmp.lt.s32.totalorder %s338, 15
          %s340 = scalar_select %p339, %s338, 15
          %s341 = smul.addr %s340, 2
          %s342 = scalar_lea.vmem %s3, %s341
        $region67: #{vgg_forward.11} parent=62 // pred_fallthru
          _
      $region63: #{vgg_forward.11} parent=5 // pred_fallthru
        _
    $region6: #{vgg_forward.11} parent=1 // loop_footer
      %s13 = sadd.s32 1, %s9
    $region7: #{vgg_forward.11} parent=1 // loop_footer_branch
      %8 = sbr.rel target = $region3
    $region8: #{vgg_forward.11} parent=1 // loop_exit
      _

// kernel: vgg_forward.12
$region0: #{vgg_forward.12}
  #allocation0 [shape = 'u32[]', space=smem, size = 0x4, offset = 0x4, fixed_abs, tag = 'smem constant byte address 0x4 - core index']
  #allocation1 [shape = 'u32[72,128]{1,0:T(1,128)}', space=vmem, size = 0x9000, scoped, tag = 'internal scratch']
  %s0 = inlined_call_operand.vmem [shape: bf16[4,4,512], index: 0, kind: input, shape index: {}]
  %s1 = inlined_call_operand.vmem [shape: bf16[4,512], index: 1, kind: output, shape index: {}]
  %s2 = sld [smem:[#allocation0]]
  $region14: #{vgg_forward.12} parent=0
    _
  %s4 = ssub.s32 1, %s2
  %s5 = scalar_select 0, %s4, %s2
  // Predicated region
  $region2: #{vgg_forward.12} parent=0 // pred_check
    _
  $region3: #{vgg_forward.12} parent=0 // pred_check_branch
    %7 = sbr.rel (0) target = $region5
  $region4: #{vgg_forward.12} parent=0 // pred_region
    _
  $region5: #{vgg_forward.12} parent=0 // pred_fallthru
    _
  %v8 = vld [vmem:[%s0] sm:$0xff]
  %s9 = scalar_lea.vmem %s0, 8
  %v10 = vld [vmem:[%s9] sm:$0xff]
  %v11 = vunpack.c.l.bf16 %v8
  %v12 = vunpack.c.h.bf16 %v8
  %v13 = vunpack.c.l.bf16 %v10
  %v14 = vunpack.c.h.bf16 %v10
  %v15 = vmax.f32 %v11, %v13
  %v16 = vmax.f32 %v12, %v14
  %19 = vst [vmem:[#allocation1] ss:$2 sm:$0xff] %v15
  %s20 = scalar_lea.vmem [#allocation1], 16
  %21 = vst [vmem:[%s20] ss:$2 sm:$0xff] %v16
  %v22 = vld.sshfl [vmem:[#allocation1] sm:$0xff pattern:$0x75316420]
  %v23 = vld.sshfl [vmem:[#allocation1 + $0x8] sm:$0xff pattern:$0x75316420]
  %v24 = vld.sshfl [vmem:[#allocation1 + $0x10] sm:$0xff pattern:$0x75316420]
  %v25 = vld.sshfl [vmem:[#allocation1 + $0x18] sm:$0xff pattern:$0x75316420]
  %v30 = vpack.c.bf16 %v23, %v22
  %v31 = vpack.c.bf16 %v25, %v24
  %s32 = scalar_lea.vmem %s0, 16
  %v33 = vld [vmem:[%s32] sm:$0xff]
  %v34 = vunpack.c.l.bf16 %v30
  %v35 = vunpack.c.h.bf16 %v30
  %v36 = vunpack.c.l.bf16 %v31
  %v37 = vunpack.c.h.bf16 %v31
  %v38 = vunpack.c.l.bf16 %v33
  %v39 = vunpack.c.h.bf16 %v33
  %42 = vst [vmem:[#allocation1] ss:$2 sm:$0xff] %v38
  %s43 = scalar_lea.vmem [#allocation1], 16
  %44 = vst [vmem:[%s43] ss:$2 sm:$0xff] %v39
  %v45 = vld.sshfl [vmem:[#allocation1] sm:$0xff pattern:$0x75316420]
  %v46 = vld.sshfl [vmem:[#allocation1 + $0x8] sm:$0xff pattern:$0x75316420]
  %v47 = vld.sshfl [vmem:[#allocation1 + $0x10] sm:$0xff pattern:$0x75316420]
  %v48 = vld.sshfl [vmem:[#allocation1 + $0x18] sm:$0xff pattern:$0x75316420]
  %v53 = vmax.f32 %v34, %v45
  %v54 = vmax.f32 %v35, %v46
  %v55 = vmax.f32 %v36, %v47
  %v56 = vmax.f32 %v37, %v48
  %v57 = vpack.c.bf16 %v54, %v53
  %v58 = vpack.c.bf16 %v56, %v55
  %s59 = scalar_lea.vmem %s0, 24
  %v60 = vld [vmem:[%s59] sm:$0xff]
  %v61 = vunpack.c.l.bf16 %v57
  %v62 = vunpack.c.h.bf16 %v57
  %v63 = vunpack.c.l.bf16 %v58
  %v64 = vunpack.c.h.bf16 %v58
  %v65 = vunpack.c.l.bf16 %v60
  %v66 = vunpack.c.h.bf16 %v60
  %69 = vst [vmem:[#allocation1] ss:$2 sm:$0xff] %v65
  %s70 = scalar_lea.vmem [#allocation1], 16
  %71 = vst [vmem:[%s70] ss:$2 sm:$0xff] %v66
  %v72 = vld.sshfl [vmem:[#allocation1] sm:$0xff pattern:$0x75316420]
  %v73 = vld.sshfl [vmem:[#allocation1 + $0x8] sm:$0xff pattern:$0x75316420]
  %v74 = vld.sshfl [vmem:[#allocation1 + $0x10] sm:$0xff pattern:$0x75316420]
  %v75 = vld.sshfl [vmem:[#allocation1 + $0x18] sm:$0xff pattern:$0x75316420]
  %v80 = vmax.f32 %v61, %v72
  %v81 = vmax.f32 %v62, %v73
  %v82 = vmax.f32 %v63, %v74
  %v83 = vmax.f32 %v64, %v75
  %v84 = vpack.c.bf16 %v81, %v80
  %v85 = vpack.c.bf16 %v83, %v82
  %v88 = vrot.slane %v84, 2
  %v89 = vrot.slane %v85, 4
  %v90 = vrot.slane %v85, 6
  %vm91 = vcmask 1041408
  %v94 = vsel %vm91, %v84, %v88
  %vm95 = vcmask 1045508
  %v98 = vsel %vm95, %v89, %v90
  %vm99 = vcmask 1043456
  %v100 = vsel %vm99, %v94, %v98
  %102 = vst [vmem:[%s1] sm:$0xff] %v100
  // Predicated region
  $region6: #{vgg_forward.12} parent=0 // pred_check
    _
  $region7: #{vgg_forward.12} parent=0 // pred_check_branch
    %104 = sbr.rel (0) target = $region9
  $region8: #{vgg_forward.12} parent=0 // pred_region
    _
  $region9: #{vgg_forward.12} parent=0 // pred_fallthru
    _
  // Predicated region
  $region10: #{vgg_forward.12} parent=0 // pred_check
    _
  $region11: #{vgg_forward.12} parent=0 // pred_check_branch
    %106 = sbr.rel (0) target = $region13
  $region12: #{vgg_forward.12} parent=0 // pred_region
    _
  $region13: #{vgg_forward.12} parent=0 // pred_fallthru
    _

// kernel: vgg_forward.13
$region0: #{vgg_forward.13}
  #allocation0 [shape = 'u32[]', space=smem, size = 0x4, offset = 0x4, fixed_abs, tag = 'smem constant byte address 0x4 - core index']
  #allocation1 [shape = 'u32[72,128]{1,0:T(1,128)}', space=vmem, size = 0x9000, scoped, tag = 'internal scratch']
  %s0 = inlined_call_operand.vmem [shape: bf16[36,512], index: 0, kind: input, shape index: {}]
  %s1 = inlined_call_operand.vmem [shape: bf16[8,36], index: 1, kind: input, shape index: {}]
  %s2 = inlined_call_operand.vmem [shape: f32[8,1], index: 2, kind: input, shape index: {}]
  %s3 = inlined_call_operand.vmem [shape: bf16[8,512], index: 3, kind: output, shape index: {}]
  %s4 = sld [smem:[#allocation0]]
  $region22: #{vgg_forward.13} parent=0
    _
  %s6 = ssub.s32 1, %s4
  %s7 = scalar_select 0, %s6, %s4
  // Predicated region
  $region2: #{vgg_forward.13} parent=0 // pred_check
    _
  $region3: #{vgg_forward.13} parent=0 // pred_check_branch
    %9 = sbr.rel (0) target = $region5
  $region4: #{vgg_forward.13} parent=0 // pred_region
    _
  $region5: #{vgg_forward.13} parent=0 // pred_fallthru
    _
  // Predicated region
  $region6: #{vgg_forward.13} parent=0 // pred_check
    _
  $region7: #{vgg_forward.13} parent=0 // pred_check_branch
    %11 = sbr.rel (0) target = $region9
  $region8: #{vgg_forward.13} parent=0 // pred_region
    _
  $region9: #{vgg_forward.13} parent=0 // pred_fallthru
    _
  // Predicated region
  $region10: #{vgg_forward.13} parent=0 // pred_check
    _
  $region11: #{vgg_forward.13} parent=0 // pred_check_branch
    %13 = sbr.rel (0) target = $region13
  $region12: #{vgg_forward.13} parent=0 // pred_region
    _
  $region13: #{vgg_forward.13} parent=0 // pred_fallthru
    _
  %v15 = vld [vmem:[%s1] sm:$0xf]
  %v16 = vld [vmem:[%s0] sm:$0xff]
  %v17 = vld [vmem:[%s0 + $0x8] sm:$0xff]
  %v18 = vld [vmem:[%s0 + $0x10] sm:$0xff]
  %v19 = vld [vmem:[%s0 + $0x18] sm:$0xff]
  %v20 = vld [vmem:[%s0 + $0x20] sm:$0xff]
  %v21 = vld [vmem:[%s0 + $0x28] sm:$0xff]
  %v22 = vld [vmem:[%s0 + $0x30] sm:$0xff]
  %v23 = vld [vmem:[%s0 + $0x38] sm:$0xff]
  %v24 = vld [vmem:[%s0 + $0x40] sm:$0x33]
  %v25 = vld [vmem:[%s0 + $0x48] sm:$0x33]
  %v26 = vld [vmem:[%s2] sm:$0xff]
  %28 = vset.pattern.permute.xlu0 0
  %29 = vperm.xlu0 %28, %v26
  %v30 = vpop.permute.xlu0 %29
  %v42 = vunpack.c.l.b16 %v16
  %v43 = vunpack.c.h.b16 %v16
  %v44 = vunpack.c.l.b16 %v17
  %v45 = vunpack.c.h.b16 %v17
  %v46 = vunpack.c.l.b16 %v18
  %v47 = vunpack.c.h.b16 %v18
  %v48 = vunpack.c.l.b16 %v19
  %v49 = vunpack.c.h.b16 %v19
  %v50 = vunpack.c.l.b16 %v20
  %v51 = vunpack.c.h.b16 %v20
  %v52 = vunpack.c.l.b16 %v21
  %v53 = vunpack.c.h.b16 %v21
  %v54 = vunpack.c.l.b16 %v22
  %v55 = vunpack.c.h.b16 %v22
  %v56 = vunpack.c.l.b16 %v23
  %v57 = vunpack.c.h.b16 %v23
  %v58 = vunpack.c.l.b16 %v24
  %v59 = vunpack.c.h.b16 %v24
  %v60 = vunpack.c.l.b16 %v25
  %v61 = vunpack.c.h.b16 %v25
  %v62 = vpack.c.b16 %v46, %v42
  %v63 = vpack.c.b16 %v47, %v43
  %v64 = vpack.c.b16 %v48, %v44
  %v65 = vpack.c.b16 %v49, %v45
  %v66 = vpack.c.b16 %v54, %v50
  %v67 = vpack.c.b16 %v55, %v51
  %v68 = vpack.c.b16 %v56, %v52
  %v69 = vpack.c.b16 %v57, %v53
  %v70 = vpack.c.b16 %v58, %v58
  %v71 = vpack.c.b16 %v59, %v59
  %v72 = vpack.c.b16 %v60, %v60
  %v73 = vpack.c.b16 %v61, %v61
  %vm82 = vcmask 293888
  %v84 = vsel %vm82, %v15, 0
  %vm86 = vcmask 1041408
  %v88 = vsel %vm86, %v70, 0
  %v91 = vsel %vm86, %v71, 0
  %v94 = vsel %vm86, %v72, 0
  %v97 = vsel %vm86, %v73, 0
  %99 = vmatpush.bf16.msra.mxu0 0
  %100 = vmatpush.bf16.msra.mxu0 0
  %101 = vmatpush.bf16.msra.mxu0 0
  %102 = vmatpush.bf16.msra.mxu0 0
  %103 = vmatpush.bf16.msra.mxu0 0
  %104 = vmatpush.bf16.msra.mxu0 %v88
  %105 = vmatpush.bf16.msra.mxu0 %v66
  %106 = vmatpush.bf16.msra.mxu0 %v62
  %107 = vmatmul.bf16.gmra.mxu0 %v84
  %v108 = vpop.f32.mrf.mxu0
  %v109 = vadd.f32 %v30, %v108
  %v110 = vpop.f32.mrf.mxu0
  %111 = vdwg.mxu0
  %112 = vmatpush.bf16.msra.mxu0 0
  %113 = vmatpush.bf16.msra.mxu0 0
  %114 = vmatpush.bf16.msra.mxu0 0
  %115 = vmatpush.bf16.msra.mxu0 0
  %116 = vmatpush.bf16.msra.mxu0 0
  %117 = vmatpush.bf16.msra.mxu0 %v91
  %118 = vmatpush.bf16.msra.mxu0 %v67
  %119 = vmatpush.bf16.msra.mxu0 %v63
  %120 = vmatmul.bf16.gmra.mxu0 %v84
  %v121 = vpop.f32.mrf.mxu0
  %v122 = vadd.f32 %v30, %v121
  %v123 = vpop.f32.mrf.mxu0
  %124 = vdwg.mxu0
  %125 = vmatpush.bf16.msra.mxu0 0
  %126 = vmatpush.bf16.msra.mxu0 0
  %127 = vmatpush.bf16.msra.mxu0 0
  %128 = vmatpush.bf16.msra.mxu0 0
  %129 = vmatpush.bf16.msra.mxu0 0
  %130 = vmatpush.bf16.msra.mxu0 %v94
  %131 = vmatpush.bf16.msra.mxu0 %v68
  %132 = vmatpush.bf16.msra.mxu0 %v64
  %133 = vmatmul.bf16.gmra.mxu0 %v84
  %v134 = vpop.f32.mrf.mxu0
  %v135 = vadd.f32 %v30, %v134
  %v136 = vpop.f32.mrf.mxu0
  %137 = vdwg.mxu0
  %138 = vmatpush.bf16.msra.mxu0 0
  %139 = vmatpush.bf16.msra.mxu0 0
  %140 = vmatpush.bf16.msra.mxu0 0
  %141 = vmatpush.bf16.msra.mxu0 0
  %142 = vmatpush.bf16.msra.mxu0 0
  %143 = vmatpush.bf16.msra.mxu0 %v97
  %144 = vmatpush.bf16.msra.mxu0 %v69
  %145 = vmatpush.bf16.msra.mxu0 %v65
  %146 = vmatmul.bf16.gmra.mxu0 %v84
  %v147 = vpop.f32.mrf.mxu0
  %v148 = vadd.f32 %v30, %v147
  %v149 = vpop.f32.mrf.mxu0
  %150 = vdwg.mxu0
  %v151 = vmax.f32 %v109, 0.0
  %v152 = vmax.f32 %v122, 0.0
  %v153 = vmax.f32 %v135, 0.0
  %v154 = vmax.f32 %v148, 0.0
  %v155 = vpack.c.bf16 %v152, %v151
  %v156 = vpack.c.bf16 %v154, %v153
  %157 = vst [vmem:[%s3] sm:$0xff] %v155
  %158 = vst [vmem:[%s3 + $0x8] sm:$0xff] %v156
  // Predicated region
  $region14: #{vgg_forward.13} parent=0 // pred_check
    _
  $region15: #{vgg_forward.13} parent=0 // pred_check_branch
    %160 = sbr.rel (0) target = $region17
  $region16: #{vgg_forward.13} parent=0 // pred_region
    _
  $region17: #{vgg_forward.13} parent=0 // pred_fallthru
    _
  // Predicated region
  $region18: #{vgg_forward.13} parent=0 // pred_check
    _
  $region19: #{vgg_forward.13} parent=0 // pred_check_branch
    %162 = sbr.rel (0) target = $region21
  $region20: #{vgg_forward.13} parent=0 // pred_region
    _
  $region21: #{vgg_forward.13} parent=0 // pred_fallthru
    _

// kernel: vgg_forward.14
$region0: #{vgg_forward.14}
  #allocation0 [shape = 'u32[]', space=smem, size = 0x4, offset = 0x4, fixed_abs, tag = 'smem constant byte address 0x4 - core index']
  #allocation1 [shape = 'u32[72,128]{1,0:T(1,128)}', space=vmem, size = 0x9000, scoped, tag = 'internal scratch']
  %s0 = inlined_call_operand.vmem [shape: bf16[4,8,128], index: 0, kind: input, shape index: {}]
  %s1 = inlined_call_operand.vmem [shape: bf16[8,128], index: 1, kind: output, shape index: {}]
  %s2 = sld [smem:[#allocation0]]
  $region14: #{vgg_forward.14} parent=0
    _
  %s4 = ssub.s32 1, %s2
  %s5 = scalar_select 0, %s4, %s2
  // Predicated region
  $region2: #{vgg_forward.14} parent=0 // pred_check
    _
  $region3: #{vgg_forward.14} parent=0 // pred_check_branch
    %7 = sbr.rel (0) target = $region5
  $region4: #{vgg_forward.14} parent=0 // pred_region
    _
  $region5: #{vgg_forward.14} parent=0 // pred_fallthru
    _
  %v8 = vld [vmem:[%s0] sm:$0xf]
  %s9 = scalar_lea.vmem %s0, 4
  %v10 = vld [vmem:[%s9] sm:$0xf]
  %v11 = vunpack.c.l.bf16 %v8
  %v12 = vunpack.c.l.bf16 %v10
  %v13 = vmax.f32 %v11, %v12
  %v14 = vpack.c.bf16 %v13, %v13
  %s15 = scalar_lea.vmem %s0, 8
  %v16 = vld [vmem:[%s15] sm:$0xf]
  %v17 = vunpack.c.l.bf16 %v14
  %v18 = vunpack.c.l.bf16 %v16
  %v19 = vmax.f32 %v17, %v18
  %v20 = vpack.c.bf16 %v19, %v19
  %s21 = scalar_lea.vmem %s0, 12
  %v22 = vld [vmem:[%s21] sm:$0xf]
  %v23 = vunpack.c.l.bf16 %v20
  %v24 = vunpack.c.l.bf16 %v22
  %v25 = vmax.f32 %v23, %v24
  %v26 = vpack.c.bf16 %v25, %v25
  %27 = vst [vmem:[%s1] sm:$0xf] %v26
  // Predicated region
  $region6: #{vgg_forward.14} parent=0 // pred_check
    _
  $region7: #{vgg_forward.14} parent=0 // pred_check_branch
    %29 = sbr.rel (0) target = $region9
  $region8: #{vgg_forward.14} parent=0 // pred_region
    _
  $region9: #{vgg_forward.14} parent=0 // pred_fallthru
    _
  // Predicated region
  $region10: #{vgg_forward.14} parent=0 // pred_check
    _
  $region11: #{vgg_forward.14} parent=0 // pred_check_branch
    %31 = sbr.rel (0) target = $region13
  $region12: #{vgg_forward.14} parent=0 // pred_region
    _
  $region13: #{vgg_forward.14} parent=0 // pred_fallthru
    _

// kernel: vgg_forward.15
$region0: #{vgg_forward.15}
  #allocation0 [shape = 'u32[]', space=smem, size = 0x4, offset = 0x4, fixed_abs, tag = 'smem constant byte address 0x4 - core index']
  #allocation1 [shape = 'u32[72,128]{1,0:T(1,128)}', space=vmem, size = 0x9000, scoped, tag = 'internal scratch']
  %s0 = inlined_call_operand.vmem [shape: bf16[72,128], index: 0, kind: input, shape index: {}]
  %s1 = inlined_call_operand.vmem [shape: bf16[16,72], index: 1, kind: input, shape index: {}]
  %s2 = inlined_call_operand.vmem [shape: f32[16,1], index: 2, kind: input, shape index: {}]
  %s3 = inlined_call_operand.vmem [shape: bf16[16,128], index: 3, kind: output, shape index: {}]
  %s4 = sld [smem:[#allocation0]]
  $region22: #{vgg_forward.15} parent=0
    _
  %s6 = ssub.s32 1, %s4
  %s7 = scalar_select 0, %s6, %s4
  // Predicated region
  $region2: #{vgg_forward.15} parent=0 // pred_check
    _
  $region3: #{vgg_forward.15} parent=0 // pred_check_branch
    %9 = sbr.rel (0) target = $region5
  $region4: #{vgg_forward.15} parent=0 // pred_region
    _
  $region5: #{vgg_forward.15} parent=0 // pred_fallthru
    _
  // Predicated region
  $region6: #{vgg_forward.15} parent=0 // pred_check
    _
  $region7: #{vgg_forward.15} parent=0 // pred_check_branch
    %11 = sbr.rel (0) target = $region9
  $region8: #{vgg_forward.15} parent=0 // pred_region
    _
  $region9: #{vgg_forward.15} parent=0 // pred_fallthru
    _
  // Predicated region
  $region10: #{vgg_forward.15} parent=0 // pred_check
    _
  $region11: #{vgg_forward.15} parent=0 // pred_check_branch
    %13 = sbr.rel (0) target = $region13
  $region12: #{vgg_forward.15} parent=0 // pred_region
    _
  $region13: #{vgg_forward.15} parent=0 // pred_fallthru
    _
  %v15 = vld [vmem:[%s1] sm:$0xf]
  %v16 = vld [vmem:[%s1 + $0x4] sm:$0xf]
  %v17 = vld [vmem:[%s0] sm:$0xf]
  %v18 = vld [vmem:[%s0 + $0x4] sm:$0xf]
  %v19 = vld [vmem:[%s0 + $0x8] sm:$0xf]
  %v20 = vld [vmem:[%s0 + $0xc] sm:$0xf]
  %v21 = vld [vmem:[%s0 + $0x10] sm:$0xf]
  %v22 = vld [vmem:[%s0 + $0x14] sm:$0xf]
  %v23 = vld [vmem:[%s0 + $0x18] sm:$0xf]
  %v24 = vld [vmem:[%s0 + $0x1c] sm:$0xf]
  %v25 = vld [vmem:[%s0 + $0x20] sm:$0xf]
  %v26 = vld [vmem:[%s2] sm:$0xff]
  %v27 = vld [vmem:[%s2 + $0x8] sm:$0xff]
  %29 = vset.pattern.permute.xlu0 0
  %30 = vperm.xlu0 %29, %v26
  %v31 = vpop.permute.xlu0 %30
  %34 = vset.pattern.permute.xlu0 0
  %35 = vperm.xlu0 %34, %v27
  %v36 = vpop.permute.xlu0 %35
  %v40 = vunpack.c.l.b16 %v15
  %v41 = vunpack.c.l.b16 %v16
  %v42 = vpack.c.b16 %v41, %v40
  %v52 = vunpack.c.l.b16 %v17
  %v53 = vunpack.c.l.b16 %v18
  %v54 = vunpack.c.l.b16 %v19
  %v55 = vunpack.c.l.b16 %v20
  %v56 = vunpack.c.l.b16 %v21
  %v57 = vunpack.c.l.b16 %v22
  %v58 = vunpack.c.l.b16 %v23
  %v59 = vunpack.c.l.b16 %v24
  %v60 = vunpack.c.l.b16 %v25
  %v61 = vpack.c.b16 %v53, %v52
  %v62 = vpack.c.b16 %v55, %v54
  %v63 = vpack.c.b16 %v57, %v56
  %v64 = vpack.c.b16 %v59, %v58
  %v65 = vpack.c.b16 %v60, %v60
  %vm70 = vcmask 588800
  %v72 = vsel %vm70, %v42, 0
  %vm74 = vcmask 1043456
  %v76 = vsel %vm74, %v65, 0
  %78 = vmatpush.bf16.msra.mxu0 0
  %79 = vmatpush.bf16.msra.mxu0 0
  %80 = vmatpush.bf16.msra.mxu0 0
  %81 = vmatpush.bf16.msra.mxu0 %v76
  %82 = vmatpush.bf16.msra.mxu0 %v64
  %83 = vmatpush.bf16.msra.mxu0 %v63
  %84 = vmatpush.bf16.msra.mxu0 %v62
  %85 = vmatpush.bf16.msra.mxu0 %v61
  %86 = vmatmul.bf16.gmra.mxu0 %v72
  %v87 = vpop.f32.mrf.mxu0
  %v88 = vadd.f32 %v31, %v87
  %v89 = vpop.f32.mrf.mxu0
  %v90 = vadd.f32 %v36, %v89
  %91 = vdwg.mxu0
  %v92 = vmax.f32 %v88, 0.0
  %v93 = vmax.f32 %v90, 0.0
  %v94 = vpack.c.bf16 %v92, %v92
  %v95 = vpack.c.bf16 %v93, %v93
  %96 = vst [vmem:[%s3] sm:$0xf] %v94
  %97 = vst [vmem:[%s3 + $0x4] sm:$0xf] %v95
  // Predicated region
  $region14: #{vgg_forward.15} parent=0 // pred_check
    _
  $region15: #{vgg_forward.15} parent=0 // pred_check_branch
    %99 = sbr.rel (0) target = $region17
  $region16: #{vgg_forward.15} parent=0 // pred_region
    _
  $region17: #{vgg_forward.15} parent=0 // pred_fallthru
    _
  // Predicated region
  $region18: #{vgg_forward.15} parent=0 // pred_check
    _
  $region19: #{vgg_forward.15} parent=0 // pred_check_branch
    %101 = sbr.rel (0) target = $region21
  $region20: #{vgg_forward.15} parent=0 // pred_region
    _
  $region21: #{vgg_forward.15} parent=0 // pred_fallthru
    _

// kernel: vgg_forward.16
$region0: #{vgg_forward.16}
  #allocation0 [shape = 'u32[]', space=smem, size = 0x4, offset = 0x4, fixed_abs, tag = 'smem constant byte address 0x4 - core index']
  #allocation1 [shape = 'u32[72,128]{1,0:T(1,128)}', space=vmem, size = 0x9000, scoped, tag = 'internal scratch']
  %s0 = inlined_call_operand.vmem [shape: bf16[144,128], index: 0, kind: input, shape index: {}]
  %s1 = inlined_call_operand.vmem [shape: bf16[16,144], index: 1, kind: input, shape index: {}]
  %s2 = inlined_call_operand.vmem [shape: f32[16,1], index: 2, kind: input, shape index: {}]
  %s3 = inlined_call_operand.vmem [shape: bf16[16,128], index: 3, kind: output, shape index: {}]
  %s4 = sld [smem:[#allocation0]]
  $region22: #{vgg_forward.16} parent=0
    _
  %s6 = ssub.s32 1, %s4
  %s7 = scalar_select 0, %s6, %s4
  // Predicated region
  $region2: #{vgg_forward.16} parent=0 // pred_check
    _
  $region3: #{vgg_forward.16} parent=0 // pred_check_branch
    %9 = sbr.rel (0) target = $region5
  $region4: #{vgg_forward.16} parent=0 // pred_region
    _
  $region5: #{vgg_forward.16} parent=0 // pred_fallthru
    _
  // Predicated region
  $region6: #{vgg_forward.16} parent=0 // pred_check
    _
  $region7: #{vgg_forward.16} parent=0 // pred_check_branch
    %11 = sbr.rel (0) target = $region9
  $region8: #{vgg_forward.16} parent=0 // pred_region
    _
  $region9: #{vgg_forward.16} parent=0 // pred_fallthru
    _
  // Predicated region
  $region10: #{vgg_forward.16} parent=0 // pred_check
    _
  $region11: #{vgg_forward.16} parent=0 // pred_check_branch
    %13 = sbr.rel (0) target = $region13
  $region12: #{vgg_forward.16} parent=0 // pred_region
    _
  $region13: #{vgg_forward.16} parent=0 // pred_fallthru
    _
  %v15 = vld [vmem:[%s1] sm:$0xff]
  %v16 = vld [vmem:[%s1 + $0x8] sm:$0xff]
  %v17 = vld [vmem:[%s0] sm:$0xf]
  %v18 = vld [vmem:[%s0 + $0x4] sm:$0xf]
  %v19 = vld [vmem:[%s0 + $0x8] sm:$0xf]
  %v20 = vld [vmem:[%s0 + $0xc] sm:$0xf]
  %v21 = vld [vmem:[%s0 + $0x10] sm:$0xf]
  %v22 = vld [vmem:[%s0 + $0x14] sm:$0xf]
  %v23 = vld [vmem:[%s0 + $0x18] sm:$0xf]
  %v24 = vld [vmem:[%s0 + $0x1c] sm:$0xf]
  %v25 = vld [vmem:[%s0 + $0x20] sm:$0xf]
  %v26 = vld [vmem:[%s0 + $0x24] sm:$0xf]
  %v27 = vld [vmem:[%s0 + $0x28] sm:$0xf]
  %v28 = vld [vmem:[%s0 + $0x2c] sm:$0xf]
  %v29 = vld [vmem:[%s0 + $0x30] sm:$0xf]
  %v30 = vld [vmem:[%s0 + $0x34] sm:$0xf]
  %v31 = vld [vmem:[%s0 + $0x38] sm:$0xf]
  %v32 = vld [vmem:[%s0 + $0x3c] sm:$0xf]
  %v33 = vld [vmem:[%s0 + $0x40] sm:$0xf]
  %v34 = vld [vmem:[%s0 + $0x44] sm:$0xf]
  %v35 = vld [vmem:[%s2] sm:$0xff]
  %v36 = vld [vmem:[%s2 + $0x8] sm:$0xff]
  %38 = vset.pattern.permute.xlu0 0
  %39 = vperm.xlu0 %38, %v35
  %v40 = vpop.permute.xlu0 %39
  %43 = vset.pattern.permute.xlu0 0
  %44 = vperm.xlu0 %43, %v36
  %v45 = vpop.permute.xlu0 %44
  %v49 = vunpack.c.l.b16 %v15
  %v50 = vunpack.c.h.b16 %v15
  %v51 = vunpack.c.l.b16 %v16
  %v52 = vunpack.c.h.b16 %v16
  %v53 = vpack.c.b16 %v51, %v49
  %v54 = vpack.c.b16 %v52, %v50
  %v74 = vunpack.c.l.b16 %v17
  %v75 = vunpack.c.l.b16 %v18
  %v76 = vunpack.c.l.b16 %v19
  %v77 = vunpack.c.l.b16 %v20
  %v78 = vunpack.c.l.b16 %v21
  %v79 = vunpack.c.l.b16 %v22
  %v80 = vunpack.c.l.b16 %v23
  %v81 = vunpack.c.l.b16 %v24
  %v82 = vunpack.c.l.b16 %v25
  %v83 = vunpack.c.l.b16 %v26
  %v84 = vunpack.c.l.b16 %v27
  %v85 = vunpack.c.l.b16 %v28
  %v86 = vunpack.c.l.b16 %v29
  %v87 = vunpack.c.l.b16 %v30
  %v88 = vunpack.c.l.b16 %v31
  %v89 = vunpack.c.l.b16 %v32
  %v90 = vunpack.c.l.b16 %v33
  %v91 = vunpack.c.l.b16 %v34
  %v92 = vpack.c.b16 %v75, %v74
  %v93 = vpack.c.b16 %v77, %v76
  %v94 = vpack.c.b16 %v79, %v78
  %v95 = vpack.c.b16 %v81, %v80
  %v96 = vpack.c.b16 %v83, %v82
  %v97 = vpack.c.b16 %v85, %v84
  %v98 = vpack.c.b16 %v87, %v86
  %v99 = vpack.c.b16 %v89, %v88
  %v100 = vpack.c.b16 %v91, %v90
  %vm110 = vcmask 130048
  %v112 = vsel %vm110, %v54, 0
  %114 = vmatpush.bf16.msra.mxu0 %v99
  %115 = vmatpush.bf16.msra.mxu0 %v98
  %116 = vmatpush.bf16.msra.mxu0 %v97
  %117 = vmatpush.bf16.msra.mxu0 %v96
  %118 = vmatpush.bf16.msra.mxu0 %v95
  %119 = vmatpush.bf16.msra.mxu0 %v94
  %120 = vmatpush.bf16.msra.mxu0 %v93
  %121 = vmatpush.bf16.msra.mxu0 %v92
  %122 = vmatmul.bf16.gmra.mxu0 %v53
  %v123 = vpop.f32.mrf.mxu0
  %v124 = vadd.f32 %v40, %v123
  %v125 = vpop.f32.mrf.mxu0
  %v126 = vadd.f32 %v45, %v125
  %127 = vdwg.mxu0
  %128 = vmatpush.bf16.msra.mxu0 0
  %129 = vmatpush.bf16.msra.mxu0 0
  %130 = vmatpush.bf16.msra.mxu0 0
  %131 = vmatpush.bf16.msra.mxu0 0
  %132 = vmatpush.bf16.msra.mxu0 0
  %133 = vmatpush.bf16.msra.mxu0 0
  %134 = vmatpush.bf16.msra.mxu0 0
  %135 = vmatpush.bf16.msra.mxu0 %v100
  %136 = vmatmul.bf16.gmra.mxu0 %v112
  %v137 = vpop.f32.mrf.mxu0
  %v138 = vadd.f32 %v124, %v137
  %v139 = vpop.f32.mrf.mxu0
  %v140 = vadd.f32 %v126, %v139
  %141 = vdwg.mxu0
  %v142 = vmax.f32 %v138, 0.0
  %v143 = vmax.f32 %v140, 0.0
  %v144 = vpack.c.bf16 %v142, %v142
  %v145 = vpack.c.bf16 %v143, %v143
  %146 = vst [vmem:[%s3] sm:$0xf] %v144
  %147 = vst [vmem:[%s3 + $0x4] sm:$0xf] %v145
  // Predicated region
  $region14: #{vgg_forward.16} parent=0 // pred_check
    _
  $region15: #{vgg_forward.16} parent=0 // pred_check_branch
    %149 = sbr.rel (0) target = $region17
  $region16: #{vgg_forward.16} parent=0 // pred_region
    _
  $region17: #{vgg_forward.16} parent=0 // pred_fallthru
    _
  // Predicated region
  $region18: #{vgg_forward.16} parent=0 // pred_check
    _
  $region19: #{vgg_forward.16} parent=0 // pred_check_branch
    %151 = sbr.rel (0) target = $region21
  $region20: #{vgg_forward.16} parent=0 // pred_region
    _
  $region21: #{vgg_forward.16} parent=0 // pred_fallthru
    _

// kernel: vgg_forward.17
$region0: #{vgg_forward.17}
  #allocation0 [shape = 'u32[]', space=smem, size = 0x4, offset = 0x4, fixed_abs, tag = 'smem constant byte address 0x4 - core index']
  #allocation1 [shape = 'u32[72,128]{1,0:T(1,128)}', space=vmem, size = 0x9000, scoped, tag = 'internal scratch']
  %s0 = inlined_call_operand.vmem [shape: bf16[2,16,128], index: 0, kind: input, shape index: {}]
  %s1 = inlined_call_operand.vmem [shape: bf16[16,128], index: 1, kind: output, shape index: {}]
  %s2 = sld [smem:[#allocation0]]
  $region14: #{vgg_forward.17} parent=0
    _
  %s4 = ssub.s32 1, %s2
  %s5 = scalar_select 0, %s4, %s2
  // Predicated region
  $region2: #{vgg_forward.17} parent=0 // pred_check
    _
  $region3: #{vgg_forward.17} parent=0 // pred_check_branch
    %7 = sbr.rel (0) target = $region5
  $region4: #{vgg_forward.17} parent=0 // pred_region
    _
  $region5: #{vgg_forward.17} parent=0 // pred_fallthru
    _
  %v8 = vld [vmem:[%s0] sm:$0xf]
  %v9 = vld [vmem:[%s0 + $0x4] sm:$0xf]
  %s10 = scalar_lea.vmem %s0, 8
  %v11 = vld [vmem:[%s10] sm:$0xf]
  %v12 = vld [vmem:[%s10 + $0x4] sm:$0xf]
  %v13 = vunpack.c.l.bf16 %v8
  %v14 = vunpack.c.l.bf16 %v9
  %v15 = vunpack.c.l.bf16 %v11
  %v16 = vunpack.c.l.bf16 %v12
  %v17 = vmax.f32 %v13, %v15
  %v18 = vmax.f32 %v14, %v16
  %v19 = vpack.c.bf16 %v17, %v17
  %v20 = vpack.c.bf16 %v18, %v18
  %21 = vst [vmem:[%s1] sm:$0xf] %v19
  %22 = vst [vmem:[%s1 + $0x4] sm:$0xf] %v20
  // Predicated region
  $region6: #{vgg_forward.17} parent=0 // pred_check
    _
  $region7: #{vgg_forward.17} parent=0 // pred_check_branch
    %24 = sbr.rel (0) target = $region9
  $region8: #{vgg_forward.17} parent=0 // pred_region
    _
  $region9: #{vgg_forward.17} parent=0 // pred_fallthru
    _
  // Predicated region
  $region10: #{vgg_forward.17} parent=0 // pred_check
    _
  $region11: #{vgg_forward.17} parent=0 // pred_check_branch
    %26 = sbr.rel (0) target = $region13
  $region12: #{vgg_forward.17} parent=0 // pred_region
    _
  $region13: #{vgg_forward.17} parent=0 // pred_fallthru
    _

// kernel: vgg_forward.18
$region0: #{vgg_forward.18}
  #allocation0 [shape = 'u32[]', space=smem, size = 0x4, offset = 0x4, fixed_abs, tag = 'smem constant byte address 0x4 - core index']
  #allocation1 [shape = 'u32[72,128]{1,0:T(1,128)}', space=vmem, size = 0x9000, scoped, tag = 'internal scratch']
  %s0 = inlined_call_operand.vmem [shape: bf16[144,128], index: 0, kind: input, shape index: {}]
  %s1 = inlined_call_operand.vmem [shape: bf16[32,144], index: 1, kind: input, shape index: {}]
  %s2 = inlined_call_operand.vmem [shape: bf16[32,128], index: 2, kind: output, shape index: {0}]
  %s3 = inlined_call_operand.vmem [shape: f32[32,128], index: 3, kind: output, shape index: {1}]
  %s4 = inlined_call_operand.vmem [shape: f32[32,128], index: 4, kind: output, shape index: {2}]
  %5 = xla_tuple %s2, %s3, %s4
  %s6 = sld [smem:[#allocation0]]
  $region34: #{vgg_forward.18} parent=0
    _
  %s8 = ssub.s32 1, %s6
  %s9 = scalar_select 0, %s8, %s6
  // Predicated region
  $region2: #{vgg_forward.18} parent=0 // pred_check
    _
  $region3: #{vgg_forward.18} parent=0 // pred_check_branch
    %11 = sbr.rel (0) target = $region5
  $region4: #{vgg_forward.18} parent=0 // pred_region
    _
  $region5: #{vgg_forward.18} parent=0 // pred_fallthru
    _
  // Predicated region
  $region6: #{vgg_forward.18} parent=0 // pred_check
    _
  $region7: #{vgg_forward.18} parent=0 // pred_check_branch
    %13 = sbr.rel (0) target = $region9
  $region8: #{vgg_forward.18} parent=0 // pred_region
    _
  $region9: #{vgg_forward.18} parent=0 // pred_fallthru
    _
  %v15 = vld [vmem:[%s1] sm:$0xff]
  %v16 = vld [vmem:[%s1 + $0x8] sm:$0xff]
  %v17 = vld [vmem:[%s1 + $0x10] sm:$0xff]
  %v18 = vld [vmem:[%s1 + $0x18] sm:$0xff]
  %v19 = vld [vmem:[%s0] sm:$0xf]
  %v20 = vld [vmem:[%s0 + $0x4] sm:$0xf]
  %v21 = vld [vmem:[%s0 + $0x8] sm:$0xf]
  %v22 = vld [vmem:[%s0 + $0xc] sm:$0xf]
  %v23 = vld [vmem:[%s0 + $0x10] sm:$0xf]
  %v24 = vld [vmem:[%s0 + $0x14] sm:$0xf]
  %v25 = vld [vmem:[%s0 + $0x18] sm:$0xf]
  %v26 = vld [vmem:[%s0 + $0x1c] sm:$0xf]
  %v27 = vld [vmem:[%s0 + $0x20] sm:$0xf]
  %v28 = vld [vmem:[%s0 + $0x24] sm:$0xf]
  %v29 = vld [vmem:[%s0 + $0x28] sm:$0xf]
  %v30 = vld [vmem:[%s0 + $0x2c] sm:$0xf]
  %v31 = vld [vmem:[%s0 + $0x30] sm:$0xf]
  %v32 = vld [vmem:[%s0 + $0x34] sm:$0xf]
  %v33 = vld [vmem:[%s0 + $0x38] sm:$0xf]
  %v34 = vld [vmem:[%s0 + $0x3c] sm:$0xf]
  %v35 = vld [vmem:[%s0 + $0x40] sm:$0xf]
  %v36 = vld [vmem:[%s0 + $0x44] sm:$0xf]
  %v41 = vunpack.c.l.b16 %v15
  %v42 = vunpack.c.h.b16 %v15
  %v43 = vunpack.c.l.b16 %v16
  %v44 = vunpack.c.h.b16 %v16
  %v45 = vunpack.c.l.b16 %v17
  %v46 = vunpack.c.h.b16 %v17
  %v47 = vunpack.c.l.b16 %v18
  %v48 = vunpack.c.h.b16 %v18
  %v49 = vpack.c.b16 %v43, %v41
  %v50 = vpack.c.b16 %v44, %v42
  %v51 = vpack.c.b16 %v47, %v45
  %v52 = vpack.c.b16 %v48, %v46
  %v73 = vunpack.c.l.b16 %v19
  %v74 = vunpack.c.l.b16 %v20
  %v75 = vunpack.c.l.b16 %v21
  %v76 = vunpack.c.l.b16 %v22
  %v77 = vunpack.c.l.b16 %v23
  %v78 = vunpack.c.l.b16 %v24
  %v79 = vunpack.c.l.b16 %v25
  %v80 = vunpack.c.l.b16 %v26
  %v81 = vunpack.c.l.b16 %v27
  %v82 = vunpack.c.l.b16 %v28
  %v83 = vunpack.c.l.b16 %v29
  %v84 = vunpack.c.l.b16 %v30
  %v85 = vunpack.c.l.b16 %v31
  %v86 = vunpack.c.l.b16 %v32
  %v87 = vunpack.c.l.b16 %v33
  %v88 = vunpack.c.l.b16 %v34
  %v89 = vunpack.c.l.b16 %v35
  %v90 = vunpack.c.l.b16 %v36
  %v91 = vpack.c.b16 %v74, %v73
  %v92 = vpack.c.b16 %v76, %v75
  %v93 = vpack.c.b16 %v78, %v77
  %v94 = vpack.c.b16 %v80, %v79
  %v95 = vpack.c.b16 %v82, %v81
  %v96 = vpack.c.b16 %v84, %v83
  %v97 = vpack.c.b16 %v86, %v85
  %v98 = vpack.c.b16 %v88, %v87
  %v99 = vpack.c.b16 %v90, %v89
  %vm109 = vcmask 130048
  %v111 = vsel %vm109, %v50, 0
  %v114 = vsel %vm109, %v52, 0
  %116 = vmatpush.bf16.msra.mxu0 %v98
  %117 = vmatpush.bf16.msra.mxu0 %v97
  %118 = vmatpush.bf16.msra.mxu0 %v96
  %119 = vmatpush.bf16.msra.mxu0 %v95
  %120 = vmatpush.bf16.msra.mxu0 %v94
  %121 = vmatpush.bf16.msra.mxu0 %v93
  %122 = vmatpush.bf16.msra.mxu0 %v92
  %123 = vmatpush.bf16.msra.mxu0 %v91
  %124 = vmatmul.bf16.gmra.mxu0 %v49
  %v125 = vpop.f32.mrf.mxu0
  %v126 = vadd.f32 0.0, %v125
  %v127 = vpop.f32.mrf.mxu0
  %v128 = vadd.f32 0.0, %v127
  %129 = vmatmul.bf16.gmra.mxu0 %v51
  %v130 = vpop.f32.mrf.mxu0
  %v131 = vadd.f32 0.0, %v130
  %v132 = vpop.f32.mrf.mxu0
  %v133 = vadd.f32 0.0, %v132
  %134 = vdwg.mxu0
  %135 = vmatpush.bf16.msra.mxu0 0
  %136 = vmatpush.bf16.msra.mxu0 0
  %137 = vmatpush.bf16.msra.mxu0 0
  %138 = vmatpush.bf16.msra.mxu0 0
  %139 = vmatpush.bf16.msra.mxu0 0
  %140 = vmatpush.bf16.msra.mxu0 0
  %141 = vmatpush.bf16.msra.mxu0 0
  %142 = vmatpush.bf16.msra.mxu0 %v99
  %143 = vmatmul.bf16.gmra.mxu0 %v111
  %v144 = vpop.f32.mrf.mxu0
  %v145 = vadd.f32 %v126, %v144
  %v146 = vpop.f32.mrf.mxu0
  %v147 = vadd.f32 %v128, %v146
  %148 = vmatmul.bf16.gmra.mxu0 %v114
  %v149 = vpop.f32.mrf.mxu0
  %v150 = vadd.f32 %v131, %v149
  %v151 = vpop.f32.mrf.mxu0
  %v152 = vadd.f32 %v133, %v151
  %153 = vdwg.mxu0
  %v154 = vpack.c.bf16 %v145, %v145
  %v155 = vpack.c.bf16 %v147, %v147
  %v156 = vpack.c.bf16 %v150, %v150
  %v157 = vpack.c.bf16 %v152, %v152
  %158 = vst [vmem:[%s2] sm:$0xf] %v154
  %159 = vst [vmem:[%s2 + $0x4] sm:$0xf] %v155
  %160 = vst [vmem:[%s2 + $0x8] sm:$0xf] %v156
  %161 = vst [vmem:[%s2 + $0xc] sm:$0xf] %v157
  %162 = vadd.xlane.f32.xlu0 %v145
  %v163 = vpop.xlane.xlu0 %162
  %164 = vadd.xlane.f32.xlu0 %v147
  %v165 = vpop.xlane.xlu0 %164
  %166 = vadd.xlane.f32.xlu0 %v150
  %v167 = vpop.xlane.xlu0 %166
  %168 = vadd.xlane.f32.xlu0 %v152
  %v169 = vpop.xlane.xlu0 %168
  %v170 = vmul.f32 %v145, %v145
  %v171 = vmul.f32 %v147, %v147
  %v172 = vmul.f32 %v150, %v150
  %v173 = vmul.f32 %v152, %v152
  %174 = vadd.xlane.f32.xlu0 %v170
  %v175 = vpop.xlane.xlu0 %174
  %176 = vadd.xlane.f32.xlu0 %v171
  %v177 = vpop.xlane.xlu0 %176
  %178 = vadd.xlane.f32.xlu0 %v172
  %v179 = vpop.xlane.xlu0 %178
  %180 = vadd.xlane.f32.xlu0 %v173
  %v181 = vpop.xlane.xlu0 %180
  %182 = vst [vmem:[%s3] sm:$0xff] %v163
  %183 = vst [vmem:[%s3 + $0x8] sm:$0xff] %v165
  %184 = vst [vmem:[%s3 + $0x10] sm:$0xff] %v167
  %185 = vst [vmem:[%s3 + $0x18] sm:$0xff] %v169
  %186 = vst [vmem:[%s4] sm:$0xff] %v175
  %187 = vst [vmem:[%s4 + $0x8] sm:$0xff] %v177
  %188 = vst [vmem:[%s4 + $0x10] sm:$0xff] %v179
  %189 = vst [vmem:[%s4 + $0x18] sm:$0xff] %v181
  // Predicated region
  $region10: #{vgg_forward.18} parent=0 // pred_check
    _
  $region11: #{vgg_forward.18} parent=0 // pred_check_branch
    %191 = sbr.rel (0) target = $region13
  $region12: #{vgg_forward.18} parent=0 // pred_region
    _
  $region13: #{vgg_forward.18} parent=0 // pred_fallthru
    _
  // Predicated region
  $region14: #{vgg_forward.18} parent=0 // pred_check
    _
  $region15: #{vgg_forward.18} parent=0 // pred_check_branch
    %193 = sbr.rel (0) target = $region17
  $region16: #{vgg_forward.18} parent=0 // pred_region
    _
  $region17: #{vgg_forward.18} parent=0 // pred_fallthru
    _
  // Predicated region
  $region18: #{vgg_forward.18} parent=0 // pred_check
    _
  $region19: #{vgg_forward.18} parent=0 // pred_check_branch
    %195 = sbr.rel (0) target = $region21
  $region20: #{vgg_forward.18} parent=0 // pred_region
    _
  $region21: #{vgg_forward.18} parent=0 // pred_fallthru
    _
  // Predicated region
  $region22: #{vgg_forward.18} parent=0 // pred_check
    _
  $region23: #{vgg_forward.18} parent=0 // pred_check_branch
    %197 = sbr.rel (0) target = $region25
  $region24: #{vgg_forward.18} parent=0 // pred_region
    _
  $region25: #{vgg_forward.18} parent=0 // pred_fallthru
    _
  // Predicated region
  $region26: #{vgg_forward.18} parent=0 // pred_check
    _
  $region27: #{vgg_forward.18} parent=0 // pred_check_branch
    %199 = sbr.rel (0) target = $region29
  $region28: #{vgg_forward.18} parent=0 // pred_region
    _
  $region29: #{vgg_forward.18} parent=0 // pred_fallthru
    _
  // Predicated region
  $region30: #{vgg_forward.18} parent=0 // pred_check
    _
  $region31: #{vgg_forward.18} parent=0 // pred_check_branch
    %201 = sbr.rel (0) target = $region33
  $region32: #{vgg_forward.18} parent=0 // pred_region
    _
  $region33: #{vgg_forward.18} parent=0 // pred_fallthru
    _

// kernel: vgg_forward.19
$region0: #{vgg_forward.19}
  #allocation0 [shape = 'u32[]', space=smem, size = 0x4, offset = 0x4, fixed_abs, tag = 'smem constant byte address 0x4 - core index']
  #allocation1 [shape = 'u32[72,128]{1,0:T(1,128)}', space=vmem, size = 0x9000, scoped, tag = 'internal scratch']
  %s0 = inlined_call_operand.vmem [shape: bf16[288,128], index: 0, kind: input, shape index: {}]
  %s1 = inlined_call_operand.vmem [shape: bf16[32,288], index: 1, kind: input, shape index: {}]
  %s2 = inlined_call_operand.vmem [shape: bf16[32,128], index: 2, kind: output, shape index: {0}]
  %s3 = inlined_call_operand.vmem [shape: f32[32,128], index: 3, kind: output, shape index: {1}]
  %s4 = inlined_call_operand.vmem [shape: f32[32,128], index: 4, kind: output, shape index: {2}]
  %5 = xla_tuple %s2, %s3, %s4
  %s6 = sld [smem:[#allocation0]]
  $region34: #{vgg_forward.19} parent=0
    _
  %s8 = ssub.s32 1, %s6
  %s9 = scalar_select 0, %s8, %s6
  // Predicated region
  $region2: #{vgg_forward.19} parent=0 // pred_check
    _
  $region3: #{vgg_forward.19} parent=0 // pred_check_branch
    %11 = sbr.rel (0) target = $region5
  $region4: #{vgg_forward.19} parent=0 // pred_region
    _
  $region5: #{vgg_forward.19} parent=0 // pred_fallthru
    _
  // Predicated region
  $region6: #{vgg_forward.19} parent=0 // pred_check
    _
  $region7: #{vgg_forward.19} parent=0 // pred_check_branch
    %13 = sbr.rel (0) target = $region9
  $region8: #{vgg_forward.19} parent=0 // pred_region
    _
  $region9: #{vgg_forward.19} parent=0 // pred_fallthru
    _
  %v15 = vld [vmem:[%s1] sm:$0xff]
  %v16 = vld [vmem:[%s1 + $0x8] sm:$0xf]
  %v17 = vld [vmem:[%s1 + $0xc] sm:$0xff]
  %v18 = vld [vmem:[%s1 + $0x14] sm:$0xf]
  %v19 = vld [vmem:[%s1 + $0x18] sm:$0xff]
  %v20 = vld [vmem:[%s1 + $0x20] sm:$0xf]
  %v21 = vld [vmem:[%s1 + $0x24] sm:$0xff]
  %v22 = vld [vmem:[%s1 + $0x2c] sm:$0xf]
  %v23 = vld [vmem:[%s0] sm:$0xf]
  %v24 = vld [vmem:[%s0 + $0x4] sm:$0xf]
  %v25 = vld [vmem:[%s0 + $0x8] sm:$0xf]
  %v26 = vld [vmem:[%s0 + $0xc] sm:$0xf]
  %v27 = vld [vmem:[%s0 + $0x10] sm:$0xf]
  %v28 = vld [vmem:[%s0 + $0x14] sm:$0xf]
  %v29 = vld [vmem:[%s0 + $0x18] sm:$0xf]
  %v30 = vld [vmem:[%s0 + $0x1c] sm:$0xf]
  %v31 = vld [vmem:[%s0 + $0x20] sm:$0xf]
  %v32 = vld [vmem:[%s0 + $0x24] sm:$0xf]
  %v33 = vld [vmem:[%s0 + $0x28] sm:$0xf]
  %v34 = vld [vmem:[%s0 + $0x2c] sm:$0xf]
  %v35 = vld [vmem:[%s0 + $0x30] sm:$0xf]
  %v36 = vld [vmem:[%s0 + $0x34] sm:$0xf]
  %v37 = vld [vmem:[%s0 + $0x38] sm:$0xf]
  %v38 = vld [vmem:[%s0 + $0x3c] sm:$0xf]
  %v39 = vld [vmem:[%s0 + $0x40] sm:$0xf]
  %v40 = vld [vmem:[%s0 + $0x44] sm:$0xf]
  %v41 = vld [vmem:[%s0 + $0x48] sm:$0xf]
  %v42 = vld [vmem:[%s0 + $0x4c] sm:$0xf]
  %v43 = vld [vmem:[%s0 + $0x50] sm:$0xf]
  %v44 = vld [vmem:[%s0 + $0x54] sm:$0xf]
  %v45 = vld [vmem:[%s0 + $0x58] sm:$0xf]
  %v46 = vld [vmem:[%s0 + $0x5c] sm:$0xf]
  %v47 = vld [vmem:[%s0 + $0x60] sm:$0xf]
  %v48 = vld [vmem:[%s0 + $0x64] sm:$0xf]
  %v49 = vld [vmem:[%s0 + $0x68] sm:$0xf]
  %v50 = vld [vmem:[%s0 + $0x6c] sm:$0xf]
  %v51 = vld [vmem:[%s0 + $0x70] sm:$0xf]
  %v52 = vld [vmem:[%s0 + $0x74] sm:$0xf]
  %v53 = vld [vmem:[%s0 + $0x78] sm:$0xf]
  %v54 = vld [vmem:[%s0 + $0x7c] sm:$0xf]
  %v55 = vld [vmem:[%s0 + $0x80] sm:$0xf]
  %v56 = vld [vmem:[%s0 + $0x84] sm:$0xf]
  %v57 = vld [vmem:[%s0 + $0x88] sm:$0xf]
  %v58 = vld [vmem:[%s0 + $0x8c] sm:$0xf]
  %v67 = vunpack.c.l.b16 %v15
  %v68 = vunpack.c.h.b16 %v15
  %v69 = vunpack.c.l.b16 %v16
  %v70 = vunpack.c.l.b16 %v17
  %v71 = vunpack.c.h.b16 %v17
  %v72 = vunpack.c.l.b16 %v18
  %v73 = vunpack.c.l.b16 %v19
  %v74 = vunpack.c.h.b16 %v19
  %v75 = vunpack.c.l.b16 %v20
  %v76 = vunpack.c.l.b16 %v21
  %v77 = vunpack.c.h.b16 %v21
  %v78 = vunpack.c.l.b16 %v22
  %v79 = vpack.c.b16 %v70, %v67
  %v80 = vpack.c.b16 %v71, %v68
  %v81 = vpack.c.b16 %v72, %v69
  %v82 = vpack.c.b16 %v76, %v73
  %v83 = vpack.c.b16 %v77, %v74
  %v84 = vpack.c.b16 %v78, %v75
  %v125 = vunpack.c.l.b16 %v23
  %v126 = vunpack.c.l.b16 %v24
  %v127 = vunpack.c.l.b16 %v25
  %v128 = vunpack.c.l.b16 %v26
  %v129 = vunpack.c.l.b16 %v27
  %v130 = vunpack.c.l.b16 %v28
  %v131 = vunpack.c.l.b16 %v29
  %v132 = vunpack.c.l.b16 %v30
  %v133 = vunpack.c.l.b16 %v31
  %v134 = vunpack.c.l.b16 %v32
  %v135 = vunpack.c.l.b16 %v33
  %v136 = vunpack.c.l.b16 %v34
  %v137 = vunpack.c.l.b16 %v35
  %v138 = vunpack.c.l.b16 %v36
  %v139 = vunpack.c.l.b16 %v37
  %v140 = vunpack.c.l.b16 %v38
  %v141 = vunpack.c.l.b16 %v39
  %v142 = vunpack.c.l.b16 %v40
  %v143 = vunpack.c.l.b16 %v41
  %v144 = vunpack.c.l.b16 %v42
  %v145 = vunpack.c.l.b16 %v43
  %v146 = vunpack.c.l.b16 %v44
  %v147 = vunpack.c.l.b16 %v45
  %v148 = vunpack.c.l.b16 %v46
  %v149 = vunpack.c.l.b16 %v47
  %v150 = vunpack.c.l.b16 %v48
  %v151 = vunpack.c.l.b16 %v49
  %v152 = vunpack.c.l.b16 %v50
  %v153 = vunpack.c.l.b16 %v51
  %v154 = vunpack.c.l.b16 %v52
  %v155 = vunpack.c.l.b16 %v53
  %v156 = vunpack.c.l.b16 %v54
  %v157 = vunpack.c.l.b16 %v55
  %v158 = vunpack.c.l.b16 %v56
  %v159 = vunpack.c.l.b16 %v57
  %v160 = vunpack.c.l.b16 %v58
  %v161 = vpack.c.b16 %v126, %v125
  %v162 = vpack.c.b16 %v128, %v127
  %v163 = vpack.c.b16 %v130, %v129
  %v164 = vpack.c.b16 %v132, %v131
  %v165 = vpack.c.b16 %v134, %v133
  %v166 = vpack.c.b16 %v136, %v135
  %v167 = vpack.c.b16 %v138, %v137
  %v168 = vpack.c.b16 %v140, %v139
  %v169 = vpack.c.b16 %v142, %v141
  %v170 = vpack.c.b16 %v144, %v143
  %v171 = vpack.c.b16 %v146, %v145
  %v172 = vpack.c.b16 %v148, %v147
  %v173 = vpack.c.b16 %v150, %v149
  %v174 = vpack.c.b16 %v152, %v151
  %v175 = vpack.c.b16 %v154, %v153
  %v176 = vpack.c.b16 %v156, %v155
  %v177 = vpack.c.b16 %v158, %v157
  %v178 = vpack.c.b16 %v160, %v159
  %vm197 = vcmask 261120
  %v199 = vsel %vm197, %v81, 0
  %v202 = vsel %vm197, %v84, 0
  %204 = vmatpush.bf16.msra.mxu0 %v168
  %205 = vmatpush.bf16.msra.mxu0 %v167
  %206 = vmatpush.bf16.msra.mxu0 %v166
  %207 = vmatpush.bf16.msra.mxu0 %v165
  %208 = vmatpush.bf16.msra.mxu0 %v164
  %209 = vmatpush.bf16.msra.mxu0 %v163
  %210 = vmatpush.bf16.msra.mxu0 %v162
  %211 = vmatpush.bf16.msra.mxu0 %v161
  %212 = vmatmul.bf16.gmra.mxu0 %v79
  %v213 = vpop.f32.mrf.mxu0
  %v214 = vadd.f32 0.0, %v213
  %v215 = vpop.f32.mrf.mxu0
  %v216 = vadd.f32 0.0, %v215
  %217 = vmatmul.bf16.gmra.mxu0 %v82
  %v218 = vpop.f32.mrf.mxu0
  %v219 = vadd.f32 0.0, %v218
  %v220 = vpop.f32.mrf.mxu0
  %v221 = vadd.f32 0.0, %v220
  %222 = vdwg.mxu0
  %223 = vmatpush.bf16.msra.mxu0 %v176
  %224 = vmatpush.bf16.msra.mxu0 %v175
  %225 = vmatpush.bf16.msra.mxu0 %v174
  %226 = vmatpush.bf16.msra.mxu0 %v173
  %227 = vmatpush.bf16.msra.mxu0 %v172
  %228 = vmatpush.bf16.msra.mxu0 %v171
  %229 = vmatpush.bf16.msra.mxu0 %v170
  %230 = vmatpush.bf16.msra.mxu0 %v169
  %231 = vmatmul.bf16.gmra.mxu0 %v80
  %v232 = vpop.f32.mrf.mxu0
  %v233 = vadd.f32 %v214, %v232
  %v234 = vpop.f32.mrf.mxu0
  %v235 = vadd.f32 %v216, %v234
  %236 = vmatmul.bf16.gmra.mxu0 %v83
  %v237 = vpop.f32.mrf.mxu0
  %v238 = vadd.f32 %v219, %v237
  %v239 = vpop.f32.mrf.mxu0
  %v240 = vadd.f32 %v221, %v239
  %241 = vdwg.mxu0
  %242 = vmatpush.bf16.msra.mxu0 0
  %243 = vmatpush.bf16.msra.mxu0 0
  %244 = vmatpush.bf16.msra.mxu0 0
  %245 = vmatpush.bf16.msra.mxu0 0
  %246 = vmatpush.bf16.msra.mxu0 0
  %247 = vmatpush.bf16.msra.mxu0 0
  %248 = vmatpush.bf16.msra.mxu0 %v178
  %249 = vmatpush.bf16.msra.mxu0 %v177
  %250 = vmatmul.bf16.gmra.mxu0 %v199
  %v251 = vpop.f32.mrf.mxu0
  %v252 = vadd.f32 %v233, %v251
  %v253 = vpop.f32.mrf.mxu0
  %v254 = vadd.f32 %v235, %v253
  %255 = vmatmul.bf16.gmra.mxu0 %v202
  %v256 = vpop.f32.mrf.mxu0
  %v257 = vadd.f32 %v238, %v256
  %v258 = vpop.f32.mrf.mxu0
  %v259 = vadd.f32 %v240, %v258
  %260 = vdwg.mxu0
  %v261 = vpack.c.bf16 %v252, %v252
  %v262 = vpack.c.bf16 %v254, %v254
  %v263 = vpack.c.bf16 %v257, %v257
  %v264 = vpack.c.bf16 %v259, %v259
  %265 = vst [vmem:[%s2] sm:$0xf] %v261
  %266 = vst [vmem:[%s2 + $0x4] sm:$0xf] %v262
  %267 = vst [vmem:[%s2 + $0x8] sm:$0xf] %v263
  %268 = vst [vmem:[%s2 + $0xc] sm:$0xf] %v264
  %269 = vadd.xlane.f32.xlu0 %v252
  %v270 = vpop.xlane.xlu0 %269
  %271 = vadd.xlane.f32.xlu0 %v254
  %v272 = vpop.xlane.xlu0 %271
  %273 = vadd.xlane.f32.xlu0 %v257
  %v274 = vpop.xlane.xlu0 %273
  %275 = vadd.xlane.f32.xlu0 %v259
  %v276 = vpop.xlane.xlu0 %275
  %v277 = vmul.f32 %v252, %v252
  %v278 = vmul.f32 %v254, %v254
  %v279 = vmul.f32 %v257, %v257
  %v280 = vmul.f32 %v259, %v259
  %281 = vadd.xlane.f32.xlu0 %v277
  %v282 = vpop.xlane.xlu0 %281
  %283 = vadd.xlane.f32.xlu0 %v278
  %v284 = vpop.xlane.xlu0 %283
  %285 = vadd.xlane.f32.xlu0 %v279
  %v286 = vpop.xlane.xlu0 %285
  %287 = vadd.xlane.f32.xlu0 %v280
  %v288 = vpop.xlane.xlu0 %287
  %289 = vst [vmem:[%s3] sm:$0xff] %v270
  %290 = vst [vmem:[%s3 + $0x8] sm:$0xff] %v272
  %291 = vst [vmem:[%s3 + $0x10] sm:$0xff] %v274
  %292 = vst [vmem:[%s3 + $0x18] sm:$0xff] %v276
  %293 = vst [vmem:[%s4] sm:$0xff] %v282
  %294 = vst [vmem:[%s4 + $0x8] sm:$0xff] %v284
  %295 = vst [vmem:[%s4 + $0x10] sm:$0xff] %v286
  %296 = vst [vmem:[%s4 + $0x18] sm:$0xff] %v288
  // Predicated region
  $region10: #{vgg_forward.19} parent=0 // pred_check
    _
  $region11: #{vgg_forward.19} parent=0 // pred_check_branch
    %298 = sbr.rel (0) target = $region13
  $region12: #{vgg_forward.19} parent=0 // pred_region
    _
  $region13: #{vgg_forward.19} parent=0 // pred_fallthru
    _
  // Predicated region
  $region14: #{vgg_forward.19} parent=0 // pred_check
    _
  $region15: #{vgg_forward.19} parent=0 // pred_check_branch
    %300 = sbr.rel (0) target = $region17
  $region16: #{vgg_forward.19} parent=0 // pred_region
    _
  $region17: #{vgg_forward.19} parent=0 // pred_fallthru
    _
  // Predicated region
  $region18: #{vgg_forward.19} parent=0 // pred_check
    _
  $region19: #{vgg_forward.19} parent=0 // pred_check_branch
    %302 = sbr.rel (0) target = $region21
  $region20: #{vgg_forward.19} parent=0 // pred_region
    _
  $region21: #{vgg_forward.19} parent=0 // pred_fallthru
    _
  // Predicated region
  $region22: #{vgg_forward.19} parent=0 // pred_check
    _
  $region23: #{vgg_forward.19} parent=0 // pred_check_branch
    %304 = sbr.rel (0) target = $region25
  $region24: #{vgg_forward.19} parent=0 // pred_region
    _
  $region25: #{vgg_forward.19} parent=0 // pred_fallthru
    _
  // Predicated region
  $region26: #{vgg_forward.19} parent=0 // pred_check
    _
  $region27: #{vgg_forward.19} parent=0 // pred_check_branch
    %306 = sbr.rel (0) target = $region29
  $region28: #{vgg_forward.19} parent=0 // pred_region
    _
  $region29: #{vgg_forward.19} parent=0 // pred_fallthru
    _
  // Predicated region
  $region30: #{vgg_forward.19} parent=0 // pred_check
    _
  $region31: #{vgg_forward.19} parent=0 // pred_check_branch
    %308 = sbr.rel (0) target = $region33
  $region32: #{vgg_forward.19} parent=0 // pred_region
    _
  $region33: #{vgg_forward.19} parent=0 // pred_fallthru
    _

// kernel: vgg_forward.20
$region0: #{vgg_forward.20}
  #allocation0 [shape = 'u32[]', space=smem, size = 0x4, offset = 0x4, fixed_abs, tag = 'smem constant byte address 0x4 - core index']
  #allocation1 [shape = 'u32[72,128]{1,0:T(1,128)}', space=vmem, size = 0x9000, scoped, tag = 'internal scratch']
  %s0 = inlined_call_operand.vmem [shape: bf16[2,32,128], index: 0, kind: input, shape index: {}]
  %s1 = inlined_call_operand.vmem [shape: f32[32,1], index: 1, kind: input, shape index: {}]
  %s2 = inlined_call_operand.vmem [shape: f32[32,1], index: 2, kind: input, shape index: {}]
  %s3 = inlined_call_operand.vmem [shape: bf16[32,128], index: 3, kind: output, shape index: {}]
  %s4 = sld [smem:[#allocation0]]
  $region22: #{vgg_forward.20} parent=0
    _
  %s6 = ssub.s32 1, %s4
  %s7 = scalar_select 0, %s6, %s4
  // Predicated region
  $region2: #{vgg_forward.20} parent=0 // pred_check
    _
  $region3: #{vgg_forward.20} parent=0 // pred_check_branch
    %9 = sbr.rel (0) target = $region5
  $region4: #{vgg_forward.20} parent=0 // pred_region
    _
  $region5: #{vgg_forward.20} parent=0 // pred_fallthru
    _
  // Predicated region
  $region6: #{vgg_forward.20} parent=0 // pred_check
    _
  $region7: #{vgg_forward.20} parent=0 // pred_check_branch
    %11 = sbr.rel (0) target = $region9
  $region8: #{vgg_forward.20} parent=0 // pred_region
    _
  $region9: #{vgg_forward.20} parent=0 // pred_fallthru
    _
  // Predicated region
  $region10: #{vgg_forward.20} parent=0 // pred_check
    _
  $region11: #{vgg_forward.20} parent=0 // pred_check_branch
    %13 = sbr.rel (0) target = $region13
  $region12: #{vgg_forward.20} parent=0 // pred_region
    _
  $region13: #{vgg_forward.20} parent=0 // pred_fallthru
    _
  %v14 = vld [vmem:[%s1] sm:$0xff]
  %v15 = vld [vmem:[%s1 + $0x8] sm:$0xff]
  %v16 = vld [vmem:[%s1 + $0x10] sm:$0xff]
  %v17 = vld [vmem:[%s1 + $0x18] sm:$0xff]
  %v18 = vld [vmem:[%s2] sm:$0xff]
  %v19 = vld [vmem:[%s2 + $0x8] sm:$0xff]
  %v20 = vld [vmem:[%s2 + $0x10] sm:$0xff]
  %v21 = vld [vmem:[%s2 + $0x18] sm:$0xff]
  %v22 = vld [vmem:[%s0] sm:$0xf]
  %v23 = vld [vmem:[%s0 + $0x4] sm:$0xf]
  %v24 = vld [vmem:[%s0 + $0x8] sm:$0xf]
  %v25 = vld [vmem:[%s0 + $0xc] sm:$0xf]
  %v26 = vunpack.c.l.bf16 %v22
  %v27 = vunpack.c.l.bf16 %v23
  %v28 = vunpack.c.l.bf16 %v24
  %v29 = vunpack.c.l.bf16 %v25
  %31 = vset.pattern.permute.xlu0 0
  %32 = vperm.xlu0 %31, %v14
  %v33 = vpop.permute.xlu0 %32
  %36 = vset.pattern.permute.xlu0 0
  %37 = vperm.xlu0 %36, %v15
  %v38 = vpop.permute.xlu0 %37
  %41 = vset.pattern.permute.xlu0 0
  %42 = vperm.xlu0 %41, %v16
  %v43 = vpop.permute.xlu0 %42
  %46 = vset.pattern.permute.xlu0 0
  %47 = vperm.xlu0 %46, %v17
  %v48 = vpop.permute.xlu0 %47
  %v50 = vmul.f32 %v26, %v33
  %v51 = vmul.f32 %v27, %v38
  %v52 = vmul.f32 %v28, %v43
  %v53 = vmul.f32 %v29, %v48
  %55 = vset.pattern.permute.xlu0 0
  %56 = vperm.xlu0 %55, %v18
  %v57 = vpop.permute.xlu0 %56
  %60 = vset.pattern.permute.xlu0 0
  %61 = vperm.xlu0 %60, %v19
  %v62 = vpop.permute.xlu0 %61
  %65 = vset.pattern.permute.xlu0 0
  %66 = vperm.xlu0 %65, %v20
  %v67 = vpop.permute.xlu0 %66
  %70 = vset.pattern.permute.xlu0 0
  %71 = vperm.xlu0 %70, %v21
  %v72 = vpop.permute.xlu0 %71
  %v74 = vadd.f32 %v50, %v57
  %v75 = vadd.f32 %v51, %v62
  %v76 = vadd.f32 %v52, %v67
  %v77 = vadd.f32 %v53, %v72
  %v78 = vmax.f32 %v74, 0.0
  %v79 = vmax.f32 %v75, 0.0
  %v80 = vmax.f32 %v76, 0.0
  %v81 = vmax.f32 %v77, 0.0
  %s82 = scalar_lea.vmem %s0, 16
  %v83 = vld [vmem:[%s82] sm:$0xf]
  %v84 = vld [vmem:[%s82 + $0x4] sm:$0xf]
  %v85 = vld [vmem:[%s82 + $0x8] sm:$0xf]
  %v86 = vld [vmem:[%s82 + $0xc] sm:$0xf]
  %v87 = vunpack.c.l.bf16 %v83
  %v88 = vunpack.c.l.bf16 %v84
  %v89 = vunpack.c.l.bf16 %v85
  %v90 = vunpack.c.l.bf16 %v86
  %v91 = vmul.f32 %v87, %v33
  %v92 = vmul.f32 %v88, %v38
  %v93 = vmul.f32 %v89, %v43
  %v94 = vmul.f32 %v90, %v48
  %v95 = vadd.f32 %v91, %v57
  %v96 = vadd.f32 %v92, %v62
  %v97 = vadd.f32 %v93, %v67
  %v98 = vadd.f32 %v94, %v72
  %v99 = vmax.f32 %v95, 0.0
  %v100 = vmax.f32 %v96, 0.0
  %v101 = vmax.f32 %v97, 0.0
  %v102 = vmax.f32 %v98, 0.0
  %v103 = vmax.f32 %v78, %v99
  %v104 = vmax.f32 %v79, %v100
  %v105 = vmax.f32 %v80, %v101
  %v106 = vmax.f32 %v81, %v102
  %v107 = vpack.c.bf16 %v103, %v103
  %v108 = vpack.c.bf16 %v104, %v104
  %v109 = vpack.c.bf16 %v105, %v105
  %v110 = vpack.c.bf16 %v106, %v106
  %111 = vst [vmem:[%s3] sm:$0xf] %v107
  %112 = vst [vmem:[%s3 + $0x4] sm:$0xf] %v108
  %113 = vst [vmem:[%s3 + $0x8] sm:$0xf] %v109
  %114 = vst [vmem:[%s3 + $0xc] sm:$0xf] %v110
  // Predicated region
  $region14: #{vgg_forward.20} parent=0 // pred_check
    _
  $region15: #{vgg_forward.20} parent=0 // pred_check_branch
    %116 = sbr.rel (0) target = $region17
  $region16: #{vgg_forward.20} parent=0 // pred_region
    _
  $region17: #{vgg_forward.20} parent=0 // pred_fallthru
    _
  // Predicated region
  $region18: #{vgg_forward.20} parent=0 // pred_check
    _
  $region19: #{vgg_forward.20} parent=0 // pred_check_branch
    %118 = sbr.rel (0) target = $region21
  $region20: #{vgg_forward.20} parent=0 // pred_region
    _
  $region21: #{vgg_forward.20} parent=0 // pred_fallthru
    _

// kernel: vgg_forward.21
$region0: #{vgg_forward.21}
  #allocation0 [shape = 'u32[]', space=smem, size = 0x4, offset = 0x4, fixed_abs, tag = 'smem constant byte address 0x4 - core index']
  #allocation1 [shape = 'u32[72,128]{1,0:T(1,128)}', space=vmem, size = 0x9000, scoped, tag = 'internal scratch']
  %s0 = inlined_call_operand.vmem [shape: bf16[128,128], index: 0, kind: input, shape index: {}]
  %s1 = inlined_call_operand.vmem [shape: bf16[32,128], index: 1, kind: input, shape index: {}]
  %s2 = inlined_call_operand.vmem [shape: f32[32,1], index: 2, kind: input, shape index: {}]
  %s3 = inlined_call_operand.vmem [shape: bf16[32,128], index: 3, kind: output, shape index: {}]
  %s4 = sld [smem:[#allocation0]]
  $region22: #{vgg_forward.21} parent=0
    _
  %s6 = ssub.s32 1, %s4
  %s7 = scalar_select 0, %s6, %s4
  // Predicated region
  $region2: #{vgg_forward.21} parent=0 // pred_check
    _
  $region3: #{vgg_forward.21} parent=0 // pred_check_branch
    %9 = sbr.rel (0) target = $region5
  $region4: #{vgg_forward.21} parent=0 // pred_region
    _
  $region5: #{vgg_forward.21} parent=0 // pred_fallthru
    _
  // Predicated region
  $region6: #{vgg_forward.21} parent=0 // pred_check
    _
  $region7: #{vgg_forward.21} parent=0 // pred_check_branch
    %11 = sbr.rel (0) target = $region9
  $region8: #{vgg_forward.21} parent=0 // pred_region
    _
  $region9: #{vgg_forward.21} parent=0 // pred_fallthru
    _
  // Predicated region
  $region10: #{vgg_forward.21} parent=0 // pred_check
    _
  $region11: #{vgg_forward.21} parent=0 // pred_check_branch
    %13 = sbr.rel (0) target = $region13
  $region12: #{vgg_forward.21} parent=0 // pred_region
    _
  $region13: #{vgg_forward.21} parent=0 // pred_fallthru
    _
  %v14 = vld [vmem:[%s1] sm:$0xf]
  %v15 = vld [vmem:[%s1 + $0x4] sm:$0xf]
  %v16 = vld [vmem:[%s1 + $0x8] sm:$0xf]
  %v17 = vld [vmem:[%s1 + $0xc] sm:$0xf]
  %v18 = vld [vmem:[%s0] sm:$0xf]
  %v19 = vld [vmem:[%s0 + $0x4] sm:$0xf]
  %v20 = vld [vmem:[%s0 + $0x8] sm:$0xf]
  %v21 = vld [vmem:[%s0 + $0xc] sm:$0xf]
  %v22 = vld [vmem:[%s0 + $0x10] sm:$0xf]
  %v23 = vld [vmem:[%s0 + $0x14] sm:$0xf]
  %v24 = vld [vmem:[%s0 + $0x18] sm:$0xf]
  %v25 = vld [vmem:[%s0 + $0x1c] sm:$0xf]
  %v26 = vld [vmem:[%s0 + $0x20] sm:$0xf]
  %v27 = vld [vmem:[%s0 + $0x24] sm:$0xf]
  %v28 = vld [vmem:[%s0 + $0x28] sm:$0xf]
  %v29 = vld [vmem:[%s0 + $0x2c] sm:$0xf]
  %v30 = vld [vmem:[%s0 + $0x30] sm:$0xf]
  %v31 = vld [vmem:[%s0 + $0x34] sm:$0xf]
  %v32 = vld [vmem:[%s0 + $0x38] sm:$0xf]
  %v33 = vld [vmem:[%s0 + $0x3c] sm:$0xf]
  %v34 = vld [vmem:[%s2] sm:$0xff]
  %v35 = vld [vmem:[%s2 + $0x8] sm:$0xff]
  %v36 = vld [vmem:[%s2 + $0x10] sm:$0xff]
  %v37 = vld [vmem:[%s2 + $0x18] sm:$0xff]
  %39 = vset.pattern.permute.xlu0 0
  %40 = vperm.xlu0 %39, %v34
  %v41 = vpop.permute.xlu0 %40
  %44 = vset.pattern.permute.xlu0 0
  %45 = vperm.xlu0 %44, %v35
  %v46 = vpop.permute.xlu0 %45
  %49 = vset.pattern.permute.xlu0 0
  %50 = vperm.xlu0 %49, %v36
  %v51 = vpop.permute.xlu0 %50
  %54 = vset.pattern.permute.xlu0 0
  %55 = vperm.xlu0 %54, %v37
  %v56 = vpop.permute.xlu0 %55
  %v62 = vunpack.c.l.b16 %v14
  %v63 = vunpack.c.l.b16 %v15
  %v64 = vunpack.c.l.b16 %v16
  %v65 = vunpack.c.l.b16 %v17
  %v66 = vpack.c.b16 %v63, %v62
  %v67 = vpack.c.b16 %v65, %v64
  %v86 = vunpack.c.l.b16 %v18
  %v87 = vunpack.c.l.b16 %v19
  %v88 = vunpack.c.l.b16 %v20
  %v89 = vunpack.c.l.b16 %v21
  %v90 = vunpack.c.l.b16 %v22
  %v91 = vunpack.c.l.b16 %v23
  %v92 = vunpack.c.l.b16 %v24
  %v93 = vunpack.c.l.b16 %v25
  %v94 = vunpack.c.l.b16 %v26
  %v95 = vunpack.c.l.b16 %v27
  %v96 = vunpack.c.l.b16 %v28
  %v97 = vunpack.c.l.b16 %v29
  %v98 = vunpack.c.l.b16 %v30
  %v99 = vunpack.c.l.b16 %v31
  %v100 = vunpack.c.l.b16 %v32
  %v101 = vunpack.c.l.b16 %v33
  %v102 = vpack.c.b16 %v87, %v86
  %v103 = vpack.c.b16 %v89, %v88
  %v104 = vpack.c.b16 %v91, %v90
  %v105 = vpack.c.b16 %v93, %v92
  %v106 = vpack.c.b16 %v95, %v94
  %v107 = vpack.c.b16 %v97, %v96
  %v108 = vpack.c.b16 %v99, %v98
  %v109 = vpack.c.b16 %v101, %v100
  %118 = vmatpush.bf16.msra.mxu0 %v109
  %119 = vmatpush.bf16.msra.mxu0 %v108
  %120 = vmatpush.bf16.msra.mxu0 %v107
  %121 = vmatpush.bf16.msra.mxu0 %v106
  %122 = vmatpush.bf16.msra.mxu0 %v105
  %123 = vmatpush.bf16.msra.mxu0 %v104
  %124 = vmatpush.bf16.msra.mxu0 %v103
  %125 = vmatpush.bf16.msra.mxu0 %v102
  %126 = vmatmul.bf16.gmra.mxu0 %v66
  %v127 = vpop.f32.mrf.mxu0
  %v128 = vadd.f32 %v41, %v127
  %v129 = vpop.f32.mrf.mxu0
  %v130 = vadd.f32 %v46, %v129
  %131 = vmatmul.bf16.gmra.mxu0 %v67
  %v132 = vpop.f32.mrf.mxu0
  %v133 = vadd.f32 %v51, %v132
  %v134 = vpop.f32.mrf.mxu0
  %v135 = vadd.f32 %v56, %v134
  %136 = vdwg.mxu0
  %v137 = vmax.f32 %v128, 0.0
  %v138 = vmax.f32 %v130, 0.0
  %v139 = vmax.f32 %v133, 0.0
  %v140 = vmax.f32 %v135, 0.0
  %v141 = vpack.c.bf16 %v137, %v137
  %v142 = vpack.c.bf16 %v138, %v138
  %v143 = vpack.c.bf16 %v139, %v139
  %v144 = vpack.c.bf16 %v140, %v140
  %145 = vst [vmem:[%s3] sm:$0xf] %v141
  %146 = vst [vmem:[%s3 + $0x4] sm:$0xf] %v142
  %147 = vst [vmem:[%s3 + $0x8] sm:$0xf] %v143
  %148 = vst [vmem:[%s3 + $0xc] sm:$0xf] %v144
  // Predicated region
  $region14: #{vgg_forward.21} parent=0 // pred_check
    _
  $region15: #{vgg_forward.21} parent=0 // pred_check_branch
    %150 = sbr.rel (0) target = $region17
  $region16: #{vgg_forward.21} parent=0 // pred_region
    _
  $region17: #{vgg_forward.21} parent=0 // pred_fallthru
    _
  // Predicated region
  $region18: #{vgg_forward.21} parent=0 // pred_check
    _
  $region19: #{vgg_forward.21} parent=0 // pred_check_branch
    %152 = sbr.rel (0) target = $region21
  $region20: #{vgg_forward.21} parent=0 // pred_region
    _
  $region21: #{vgg_forward.21} parent=0 // pred_fallthru
    _

</llo_original>
